<compile_context>
chip_gen: v7x
topology: tpu7x:2x2x1
jax: 0.10.0
libtpu: 0.0.40
codegen_flags: <defaults>
</compile_context>

<pallas_src>
import functools

import jax
import jax.numpy as jnp
from jax.experimental import pallas as pl
from jax.experimental.pallas import tpu as pltpu

LANES = 128
SUBLANES = 8
ROW_ALIGN = 32                         # block-row multiple safe for f32/bf16/int8 packing
TARGET_BLOCK_BYTES = 4 * 1024 * 1024   # ~4 MiB per input per block
VMEM_LIMIT_BYTES = 48 * 1024 * 1024    # 2 inputs x 2 bufs x 4 MiB + acc + temps
SMALL_N_FALLBACK = 1 << 14             # tiny tensors: pallas launch is pure overhead


def _mse_sum_kernel(x_ref, t_ref, out_ref, acc_ref, *, rows, block_rows, need_mask):
    i = pl.program_id(0)

    @pl.when(i == 0)
    def _():
        acc_ref[...] = jnp.zeros_like(acc_ref)

    # Native-dtype streaming; cast to f32 in-kernel (halves HBM traffic for bf16).
    d = x_ref[...].astype(jnp.float32) - t_ref[...].astype(jnp.float32)
    sq = d * d

    def accumulate(vals):
        # (block_rows, C) -> (block_rows//8, 8, C) splits the sublane dim on
        # tile boundaries (no relayout); sum(axis=0) is elementwise VPU adds
        # into a single (8, C) accumulator (no full-block acc load/store).
        acc_ref[...] += vals.reshape(
            block_rows // SUBLANES, SUBLANES, vals.shape[-1]).sum(axis=0)

    if need_mask:
        is_edge = i == pl.num_programs(0) - 1

        @pl.when(is_edge)
        def _():
            # Only the final block can contain padded / unspecified rows.
            row0 = i * block_rows
            local = jax.lax.broadcasted_iota(jnp.int32, sq.shape, 0)
            accumulate(jnp.where(row0 + local < rows, sq, 0.0))

        @pl.when(jnp.logical_not(is_edge))
        def _():
            accumulate(sq)
    else:
        accumulate(sq)

    @pl.when(i == pl.num_programs(0) - 1)
    def _():
        out_ref[0, 0] = jnp.sum(acc_ref[...])   # single final cross-lane reduce


def _mse_fallback(x, target):
    d = x.astype(jnp.float32) - target.astype(jnp.float32)
    return jnp.mean(d * d)


def content_loss(x, target):
    """MSE loss between x and target (matching shapes). Returns scalar f32."""
    assert x.shape == target.shape, "input and target must have the same shape"
    n = x.size
    if n == 0:
        return jnp.float32(0.0)

    # Tiny tensors: kernel launch + pipeline overhead dominates -> plain JAX.
    if n < SMALL_N_FALLBACK or x.ndim == 0:
        return _mse_fallback(x, target)

    # Collapse leading dims only -> (rows, C).  The trailing (lane) dim is left
    # untouched, so this is layout-preserving for TPU tiled layouts in the
    # common NCHW case (unlike a flatten-to-(n/128,128)+pad, which forces a
    # full HBM read+write relayout of both inputs).
    if x.ndim == 1:
        x2, t2 = x.reshape(1, n), target.reshape(1, n)
    else:
        c_last = x.shape[-1]
        x2, t2 = x.reshape(-1, c_last), target.reshape(-1, c_last)
    rows, c = x2.shape

    itemsize = max(x.dtype.itemsize, target.dtype.itemsize)
    c_padded = ((c + LANES - 1) // LANES) * LANES      # lane padding in HBM/VMEM
    bytes_per_row = c_padded * itemsize

    # Degenerate shapes (too few rows, or one row wider than a whole block).
    if rows < ROW_ALIGN or ROW_ALIGN * bytes_per_row > TARGET_BLOCK_BYTES:
        return _mse_fallback(x, target)

    block_rows = max(
        ROW_ALIGN,
        min((TARGET_BLOCK_BYTES // bytes_per_row) // ROW_ALIGN * ROW_ALIGN,
            rows // ROW_ALIGN * ROW_ALIGN))
    grid_steps = pl.cdiv(rows, block_rows)
    need_mask = (rows % block_rows) != 0   # only the final block can be partial

    kernel = functools.partial(
        _mse_sum_kernel, rows=rows, block_rows=block_rows, need_mask=need_mask)

    cost = pl.CostEstimate(
        flops=3 * n,
        transcendentals=0,
        bytes_accessed=n * (x.dtype.itemsize + target.dtype.itemsize) + 4)

    total = pl.pallas_call(
        kernel,
        out_shape=jax.ShapeDtypeStruct((1, 1), jnp.float32),
        grid_spec=pltpu.PrefetchScalarGridSpec(
            num_scalar_prefetch=0,
            grid=(grid_steps,),
            in_specs=[
                pl.BlockSpec((block_rows, c), lambda i: (i, 0)),
                pl.BlockSpec((block_rows, c), lambda i: (i, 0)),
            ],
            out_specs=pl.BlockSpec((1, 1), lambda i: (0, 0),
                                   memory_space=pltpu.SMEM),
            scratch_shapes=[pltpu.VMEM((SUBLANES, c), jnp.float32)],
        ),
        compiler_params=pltpu.CompilerParams(
            dimension_semantics=("arbitrary",),
            vmem_limit_bytes=VMEM_LIMIT_BYTES,
        ),
        cost_estimate=cost,
    )(x2, t2)

    # n is a trace-time constant: divide in the wrapper, no SMEM scalar operand.
    return (total[0, 0] / jnp.float32(n)).astype(jnp.float32)


class ContentLossPallas:
    """Mirrors the PyTorch ContentLoss module: stores a (detached) target,
    __call__(input) returns F.mse_loss(input, target)."""

    # TODO(synk): add a custom_vjp with the analytic backward 2*(x-t)/N for
    # efficient gradients during style-transfer optimization.

    def __init__(self, target):
        self.target = jax.lax.stop_gradient(target)

    def __call__(self, x):
        return content_loss(x, self.target)


if __name__ == "__main__":
    key = jax.random.PRNGKey(0)

    def ref_mse(a, b):
        return jnp.mean((a.astype(jnp.float32) - b.astype(jnp.float32)) ** 2)

    checks = []

    # 1) tiny "content layer" demo shape -> small-input (plain-JAX) path
    k1, k2 = jax.random.split(key)
    x_s = jax.random.normal(k1, (2, 4, 16, 16), dtype=jnp.float32)
    t_s = jax.random.normal(k2, (2, 4, 16, 16), dtype=jnp.float32)
    checks.append((ContentLossPallas(t_s)(x_s), ref_mse(x_s, t_s), 1e-5, 1e-6))

    # 2) lane-unaligned trailing dim (C=32), single-block kernel path
    k3, k4 = jax.random.split(k2)
    x_m = jax.random.normal(k3, (2, 32, 32, 32), dtype=jnp.float32)
    t_m = jax.random.normal(k4, (2, 32, 32, 32), dtype=jnp.float32)
    checks.append((ContentLossPallas(t_m)(x_m), ref_mse(x_m, t_m), 1e-4, 1e-6))

    # 3) bf16 inputs streamed in native dtype (f32 cast inside the kernel)
    x_b, t_b = x_m.astype(jnp.bfloat16), t_m.astype(jnp.bfloat16)
    checks.append((ContentLossPallas(t_b)(x_b), ref_mse(x_b, t_b), 1e-3, 1e-5))

    # 4) VGG-like content layer: multi-step grid with a masked partial edge block
    k5, k6 = jax.random.split(k4)
    x_l = jax.random.normal(k5, (1, 96, 96, 128), dtype=jnp.float32)
    t_l = jax.random.normal(k6, (1, 96, 96, 128), dtype=jnp.float32)
    checks.append((ContentLossPallas(t_l)(x_l), ref_mse(x_l, t_l), 1e-4, 1e-6))

    for got, want, rtol, atol in checks:
        got = jax.block_until_ready(got)
        assert jnp.allclose(got, want, rtol=rtol, atol=atol), (got, want)

    print("KERNEL_OK")
</pallas_src>

<mosaic_0001>
module attributes {stable_mosaic.version = 11 : i64} {
  func.func @_mse_sum_kernel(%arg0: i32, %arg1: memref<2048x32xf32, #tpu.memory_space<vmem>>, %arg2: memref<2048x32xf32, #tpu.memory_space<vmem>>, %arg3: memref<1x1xf32, #tpu.memory_space<smem>>, %arg4: memref<8x32xf32, #tpu.memory_space<vmem>>) attributes {dimension_semantics = [#tpu.dimension_semantics<arbitrary>], iteration_bounds = array<i64: 1>, scalar_prefetch = 0 : i64, scratch_operands = 1 : i64, tpu.core_type = #tpu.core_type<tc>, window_params = [{transform_indices = @transform_0, window_bounds = array<i64: 2048, 32>}, {transform_indices = @transform_1, window_bounds = array<i64: 2048, 32>}, {transform_indices = @transform_2, window_bounds = array<i64: 1, 1>}]} {
    %c0_i32 = arith.constant 0 : i32
    %0 = arith.cmpi eq, %arg0, %c0_i32 : i32
    %1 = arith.extui %0 : i1 to i32
    %c0_i32_0 = arith.constant 0 : i32
    %2 = arith.cmpi ne, %1, %c0_i32_0 : i32
    scf.if %2 {
      %cst_10 = arith.constant 0.000000e+00 : f32
      %15 = vector.broadcast %cst_10 : f32 to vector<8x32xf32>
      %c0_11 = arith.constant 0 : index
      %c0_12 = arith.constant 0 : index
      %16 = vector.load %arg4[%c0_11, %c0_12] : memref<8x32xf32, #tpu.memory_space<vmem>>, vector<8x32xf32>
      tpu.vector_store %arg4[%c0_11, %c0_12], %15 {strides = array<i32>} : memref<8x32xf32, #tpu.memory_space<vmem>>, vector<8x32xf32>,
    } else {
    }
    %c0 = arith.constant 0 : index
    %c0_1 = arith.constant 0 : index
    %3 = vector.load %arg1[%c0, %c0_1] : memref<2048x32xf32, #tpu.memory_space<vmem>>, vector<2048x32xf32>
    %c0_2 = arith.constant 0 : index
    %c0_3 = arith.constant 0 : index
    %4 = vector.load %arg2[%c0_2, %c0_3] : memref<2048x32xf32, #tpu.memory_space<vmem>>, vector<2048x32xf32>
    %5 = arith.subf %3, %4 : vector<2048x32xf32>
    %6 = arith.mulf %5, %5 : vector<2048x32xf32>
    %c0_4 = arith.constant 0 : index
    %c0_5 = arith.constant 0 : index
    %7 = vector.load %arg4[%c0_4, %c0_5] : memref<8x32xf32, #tpu.memory_space<vmem>>, vector<8x32xf32>
    %8 = vector.shape_cast %6 : vector<2048x32xf32> to vector<256x8x32xf32>
    %cst = arith.constant dense<0.000000e+00> : vector<8x32xf32>
    %9 = vector.multi_reduction <add>, %8, %cst [0] : vector<256x8x32xf32> to vector<8x32xf32>
    %10 = arith.addf %7, %9 : vector<8x32xf32>
    %c0_6 = arith.constant 0 : index
    %c0_7 = arith.constant 0 : index
    %11 = vector.load %arg4[%c0_6, %c0_7] : memref<8x32xf32, #tpu.memory_space<vmem>>, vector<8x32xf32>
    tpu.vector_store %arg4[%c0_6, %c0_7], %10 {strides = array<i32>} : memref<8x32xf32, #tpu.memory_space<vmem>>, vector<8x32xf32>,
    %c0_i32_8 = arith.constant 0 : i32
    %12 = arith.cmpi eq, %arg0, %c0_i32_8 : i32
    %13 = arith.extui %12 : i1 to i32
    %c0_i32_9 = arith.constant 0 : i32
    %14 = arith.cmpi ne, %13, %c0_i32_9 : i32
    scf.if %14 {
      %c0_10 = arith.constant 0 : index
      %c0_11 = arith.constant 0 : index
      %15 = vector.load %arg4[%c0_10, %c0_11] : memref<8x32xf32, #tpu.memory_space<vmem>>, vector<8x32xf32>
      %16 = vector.shape_cast %15 : vector<8x32xf32> to vector<1x8x32xf32>
      %cst_12 = arith.constant dense<0.000000e+00> : vector<1xf32>
      %17 = vector.multi_reduction <add>, %16, %cst_12 [1, 2] : vector<1x8x32xf32> to vector<1xf32>
      %18 = vector.shape_cast %17 : vector<1xf32> to vector<1x1x1xf32>
      %19 = vector.extract %18[0, 0, 0] : f32 from vector<1x1x1xf32>
      %c0_13 = arith.constant 0 : index
      %c0_14 = arith.constant 0 : index
      %20 = memref.load %arg3[%c0_13, %c0_14] : memref<1x1xf32, #tpu.memory_space<smem>>
      memref.store %19, %arg3[%c0_13, %c0_14] : memref<1x1xf32, #tpu.memory_space<smem>>
    } else {
    }
    return
  }
  func.func @transform_0(%arg0: i32) -> (i32, i32) {
    %c0_i32 = arith.constant 0 : i32
    %c0_i32_0 = arith.constant 0 : i32
    return %arg0, %c0_i32 : i32, i32
  }
  func.func @transform_1(%arg0: i32) -> (i32, i32) {
    %c0_i32 = arith.constant 0 : i32
    %c0_i32_0 = arith.constant 0 : i32
    return %arg0, %c0_i32 : i32, i32
  }
  func.func @transform_2(%arg0: i32) -> (i32, i32) {
    %c0_i32 = arith.constant 0 : i32
    %c0_i32_0 = arith.constant 0 : i32
    %c0_i32_1 = arith.constant 0 : i32
    return %c0_i32, %c0_i32_0 : i32, i32
  }
}

</mosaic_0001>

<llo_original>
// kernel: tpu_custom_call.1
$region0: #{tpu_custom_call.1}
  #allocation0 [shape = 'u32[]', space=smem, size = 0x4, offset = 0x4, fixed_abs, tag = 'smem constant byte address 0x4 - core index']
  #allocation1 [shape = 'u32[144,128]{1,0:T(1,128)}', space=vmem, size = 0x12000, scoped, tag = 'internal scratch']
  #allocation2 [shape = 'f32[8,32]{1,0:T(8,128)}', space=vmem, size = 0x1000, scoped, tag = 'scratch operand']
  %s0 = inlined_call_operand.vmem [shape: f32[2048,32], index: 0, kind: input, shape index: {}]
  %s1 = inlined_call_operand.vmem [shape: f32[2048,32], index: 1, kind: input, shape index: {}]
  %s2 = inlined_call_operand.hbm [shape: f32[1,1], index: 2, kind: output, shape index: {}]
  %s3 = sld [smem:[#allocation0]]
  $region26: #{tpu_custom_call.1} parent=0
    _
  %s5 = ssub.s32 1, %s3
  %s6 = scalar_select 0, %s5, %s3
  $region1: #{tpu_custom_call.1} parent=0
    #allocation3 [shape = 'u8[512]{0}', space=smem, size = 0x200, scoped, tag = 'output window, operand 0, single buffered']
    #allocation4 [shape = 's32[1]{0}', space=sflag, size = 0x4, scoped, tag = 'scoped memory for tpu_custom_call.1']
    %7 = vsyncpa [#allocation4], 0
    // Predicated region
    $region2: #{tpu_custom_call.1} parent=1 // pred_check
      _
    $region3: #{tpu_custom_call.1} parent=1 // pred_check_branch
      %9 = sbr.rel (0) target = $region5
    $region4: #{tpu_custom_call.1} parent=1 // pred_region
      _
    $region5: #{tpu_custom_call.1} parent=1 // pred_fallthru
      _
    // Predicated region
    $region6: #{tpu_custom_call.1} parent=1 // pred_check
      _
    $region7: #{tpu_custom_call.1} parent=1 // pred_check_branch
      %11 = sbr.rel (0) target = $region9
    $region8: #{tpu_custom_call.1} parent=1 // pred_region
      _
    $region9: #{tpu_custom_call.1} parent=1 // pred_fallthru
      _
    %p12 = scmp.eq.s32.totalorder 0, 0
    // Predicated region
    $region10: #{tpu_custom_call.1} parent=1 // pred_check
      %p13 = pneg %p12
    $region11: #{tpu_custom_call.1} parent=1 // pred_check_branch
      %15 = sbr.rel (%p13) target = $region13
    $region12: #{tpu_custom_call.1} parent=1 // pred_region
      %vm16 = vcmask 261120
      %17 = vst.msk [vmem:[#allocation2] sm:$0xff] %vm16, 0.0
    $region13: #{tpu_custom_call.1} parent=1 // pred_fallthru
      _
    %v18 = vld [vmem:[%s0] sm:$0xff]
    %v19 = vld [vmem:[%s0 + $0x8] sm:$0xff]
    %v20 = vld [vmem:[%s0 + $0x10] sm:$0xff]
    %v21 = vld [vmem:[%s0 + $0x18] sm:$0xff]
    %v22 = vld [vmem:[%s0 + $0x20] sm:$0xff]
    %v23 = vld [vmem:[%s0 + $0x28] sm:$0xff]
    %v24 = vld [vmem:[%s0 + $0x30] sm:$0xff]
    %v25 = vld [vmem:[%s0 + $0x38] sm:$0xff]
    %v26 = vld [vmem:[%s0 + $0x40] sm:$0xff]
    %v27 = vld [vmem:[%s0 + $0x48] sm:$0xff]
    %v28 = vld [vmem:[%s0 + $0x50] sm:$0xff]
    %v29 = vld [vmem:[%s0 + $0x58] sm:$0xff]
    %v30 = vld [vmem:[%s0 + $0x60] sm:$0xff]
    %v31 = vld [vmem:[%s0 + $0x68] sm:$0xff]
    %v32 = vld [vmem:[%s0 + $0x70] sm:$0xff]
    %v33 = vld [vmem:[%s0 + $0x78] sm:$0xff]
    %v34 = vld [vmem:[%s0 + $0x80] sm:$0xff]
    %v35 = vld [vmem:[%s0 + $0x88] sm:$0xff]
    %v36 = vld [vmem:[%s0 + $0x90] sm:$0xff]
    %v37 = vld [vmem:[%s0 + $0x98] sm:$0xff]
    %v38 = vld [vmem:[%s0 + $0xa0] sm:$0xff]
    %v39 = vld [vmem:[%s0 + $0xa8] sm:$0xff]
    %v40 = vld [vmem:[%s0 + $0xb0] sm:$0xff]
    %v41 = vld [vmem:[%s0 + $0xb8] sm:$0xff]
    %v42 = vld [vmem:[%s0 + $0xc0] sm:$0xff]
    %v43 = vld [vmem:[%s0 + $0xc8] sm:$0xff]
    %v44 = vld [vmem:[%s0 + $0xd0] sm:$0xff]
    %v45 = vld [vmem:[%s0 + $0xd8] sm:$0xff]
    %v46 = vld [vmem:[%s0 + $0xe0] sm:$0xff]
    %v47 = vld [vmem:[%s0 + $0xe8] sm:$0xff]
    %v48 = vld [vmem:[%s0 + $0xf0] sm:$0xff]
    %v49 = vld [vmem:[%s0 + $0xf8] sm:$0xff]
    %v50 = vld [vmem:[%s0 + $0x100] sm:$0xff]
    %v51 = vld [vmem:[%s0 + $0x108] sm:$0xff]
    %v52 = vld [vmem:[%s0 + $0x110] sm:$0xff]
    %v53 = vld [vmem:[%s0 + $0x118] sm:$0xff]
    %v54 = vld [vmem:[%s0 + $0x120] sm:$0xff]
    %v55 = vld [vmem:[%s0 + $0x128] sm:$0xff]
    %v56 = vld [vmem:[%s0 + $0x130] sm:$0xff]
    %v57 = vld [vmem:[%s0 + $0x138] sm:$0xff]
    %v58 = vld [vmem:[%s0 + $0x140] sm:$0xff]
    %v59 = vld [vmem:[%s0 + $0x148] sm:$0xff]
    %v60 = vld [vmem:[%s0 + $0x150] sm:$0xff]
    %v61 = vld [vmem:[%s0 + $0x158] sm:$0xff]
    %v62 = vld [vmem:[%s0 + $0x160] sm:$0xff]
    %v63 = vld [vmem:[%s0 + $0x168] sm:$0xff]
    %v64 = vld [vmem:[%s0 + $0x170] sm:$0xff]
    %v65 = vld [vmem:[%s0 + $0x178] sm:$0xff]
    %v66 = vld [vmem:[%s0 + $0x180] sm:$0xff]
    %v67 = vld [vmem:[%s0 + $0x188] sm:$0xff]
    %v68 = vld [vmem:[%s0 + $0x190] sm:$0xff]
    %v69 = vld [vmem:[%s0 + $0x198] sm:$0xff]
    %v70 = vld [vmem:[%s0 + $0x1a0] sm:$0xff]
    %v71 = vld [vmem:[%s0 + $0x1a8] sm:$0xff]
    %v72 = vld [vmem:[%s0 + $0x1b0] sm:$0xff]
    %v73 = vld [vmem:[%s0 + $0x1b8] sm:$0xff]
    %v74 = vld [vmem:[%s0 + $0x1c0] sm:$0xff]
    %v75 = vld [vmem:[%s0 + $0x1c8] sm:$0xff]
    %v76 = vld [vmem:[%s0 + $0x1d0] sm:$0xff]
    %v77 = vld [vmem:[%s0 + $0x1d8] sm:$0xff]
    %v78 = vld [vmem:[%s0 + $0x1e0] sm:$0xff]
    %v79 = vld [vmem:[%s0 + $0x1e8] sm:$0xff]
    %v80 = vld [vmem:[%s0 + $0x1f0] sm:$0xff]
    %v81 = vld [vmem:[%s0 + $0x1f8] sm:$0xff]
    %v82 = vld [vmem:[%s0 + $0x200] sm:$0xff]
    %v83 = vld [vmem:[%s0 + $0x208] sm:$0xff]
    %v84 = vld [vmem:[%s0 + $0x210] sm:$0xff]
    %v85 = vld [vmem:[%s0 + $0x218] sm:$0xff]
    %v86 = vld [vmem:[%s0 + $0x220] sm:$0xff]
    %v87 = vld [vmem:[%s0 + $0x228] sm:$0xff]
    %v88 = vld [vmem:[%s0 + $0x230] sm:$0xff]
    %v89 = vld [vmem:[%s0 + $0x238] sm:$0xff]
    %v90 = vld [vmem:[%s0 + $0x240] sm:$0xff]
    %v91 = vld [vmem:[%s0 + $0x248] sm:$0xff]
    %v92 = vld [vmem:[%s0 + $0x250] sm:$0xff]
    %v93 = vld [vmem:[%s0 + $0x258] sm:$0xff]
    %v94 = vld [vmem:[%s0 + $0x260] sm:$0xff]
    %v95 = vld [vmem:[%s0 + $0x268] sm:$0xff]
    %v96 = vld [vmem:[%s0 + $0x270] sm:$0xff]
    %v97 = vld [vmem:[%s0 + $0x278] sm:$0xff]
    %v98 = vld [vmem:[%s0 + $0x280] sm:$0xff]
    %v99 = vld [vmem:[%s0 + $0x288] sm:$0xff]
    %v100 = vld [vmem:[%s0 + $0x290] sm:$0xff]
    %v101 = vld [vmem:[%s0 + $0x298] sm:$0xff]
    %v102 = vld [vmem:[%s0 + $0x2a0] sm:$0xff]
    %v103 = vld [vmem:[%s0 + $0x2a8] sm:$0xff]
    %v104 = vld [vmem:[%s0 + $0x2b0] sm:$0xff]
    %v105 = vld [vmem:[%s0 + $0x2b8] sm:$0xff]
    %v106 = vld [vmem:[%s0 + $0x2c0] sm:$0xff]
    %v107 = vld [vmem:[%s0 + $0x2c8] sm:$0xff]
    %v108 = vld [vmem:[%s0 + $0x2d0] sm:$0xff]
    %v109 = vld [vmem:[%s0 + $0x2d8] sm:$0xff]
    %v110 = vld [vmem:[%s0 + $0x2e0] sm:$0xff]
    %v111 = vld [vmem:[%s0 + $0x2e8] sm:$0xff]
    %v112 = vld [vmem:[%s0 + $0x2f0] sm:$0xff]
    %v113 = vld [vmem:[%s0 + $0x2f8] sm:$0xff]
    %v114 = vld [vmem:[%s0 + $0x300] sm:$0xff]
    %v115 = vld [vmem:[%s0 + $0x308] sm:$0xff]
    %v116 = vld [vmem:[%s0 + $0x310] sm:$0xff]
    %v117 = vld [vmem:[%s0 + $0x318] sm:$0xff]
    %v118 = vld [vmem:[%s0 + $0x320] sm:$0xff]
    %v119 = vld [vmem:[%s0 + $0x328] sm:$0xff]
    %v120 = vld [vmem:[%s0 + $0x330] sm:$0xff]
    %v121 = vld [vmem:[%s0 + $0x338] sm:$0xff]
    %v122 = vld [vmem:[%s0 + $0x340] sm:$0xff]
    %v123 = vld [vmem:[%s0 + $0x348] sm:$0xff]
    %v124 = vld [vmem:[%s0 + $0x350] sm:$0xff]
    %v125 = vld [vmem:[%s0 + $0x358] sm:$0xff]
    %v126 = vld [vmem:[%s0 + $0x360] sm:$0xff]
    %v127 = vld [vmem:[%s0 + $0x368] sm:$0xff]
    %v128 = vld [vmem:[%s0 + $0x370] sm:$0xff]
    %v129 = vld [vmem:[%s0 + $0x378] sm:$0xff]
    %v130 = vld [vmem:[%s0 + $0x380] sm:$0xff]
    %v131 = vld [vmem:[%s0 + $0x388] sm:$0xff]
    %v132 = vld [vmem:[%s0 + $0x390] sm:$0xff]
    %v133 = vld [vmem:[%s0 + $0x398] sm:$0xff]
    %v134 = vld [vmem:[%s0 + $0x3a0] sm:$0xff]
    %v135 = vld [vmem:[%s0 + $0x3a8] sm:$0xff]
    %v136 = vld [vmem:[%s0 + $0x3b0] sm:$0xff]
    %v137 = vld [vmem:[%s0 + $0x3b8] sm:$0xff]
    %v138 = vld [vmem:[%s0 + $0x3c0] sm:$0xff]
    %v139 = vld [vmem:[%s0 + $0x3c8] sm:$0xff]
    %v140 = vld [vmem:[%s0 + $0x3d0] sm:$0xff]
    %v141 = vld [vmem:[%s0 + $0x3d8] sm:$0xff]
    %v142 = vld [vmem:[%s0 + $0x3e0] sm:$0xff]
    %v143 = vld [vmem:[%s0 + $0x3e8] sm:$0xff]
    %v144 = vld [vmem:[%s0 + $0x3f0] sm:$0xff]
    %v145 = vld [vmem:[%s0 + $0x3f8] sm:$0xff]
    %v146 = vld [vmem:[%s0 + $0x400] sm:$0xff]
    %v147 = vld [vmem:[%s0 + $0x408] sm:$0xff]
    %v148 = vld [vmem:[%s0 + $0x410] sm:$0xff]
    %v149 = vld [vmem:[%s0 + $0x418] sm:$0xff]
    %v150 = vld [vmem:[%s0 + $0x420] sm:$0xff]
    %v151 = vld [vmem:[%s0 + $0x428] sm:$0xff]
    %v152 = vld [vmem:[%s0 + $0x430] sm:$0xff]
    %v153 = vld [vmem:[%s0 + $0x438] sm:$0xff]
    %v154 = vld [vmem:[%s0 + $0x440] sm:$0xff]
    %v155 = vld [vmem:[%s0 + $0x448] sm:$0xff]
    %v156 = vld [vmem:[%s0 + $0x450] sm:$0xff]
    %v157 = vld [vmem:[%s0 + $0x458] sm:$0xff]
    %v158 = vld [vmem:[%s0 + $0x460] sm:$0xff]
    %v159 = vld [vmem:[%s0 + $0x468] sm:$0xff]
    %v160 = vld [vmem:[%s0 + $0x470] sm:$0xff]
    %v161 = vld [vmem:[%s0 + $0x478] sm:$0xff]
    %v162 = vld [vmem:[%s0 + $0x480] sm:$0xff]
    %v163 = vld [vmem:[%s0 + $0x488] sm:$0xff]
    %v164 = vld [vmem:[%s0 + $0x490] sm:$0xff]
    %v165 = vld [vmem:[%s0 + $0x498] sm:$0xff]
    %v166 = vld [vmem:[%s0 + $0x4a0] sm:$0xff]
    %v167 = vld [vmem:[%s0 + $0x4a8] sm:$0xff]
    %v168 = vld [vmem:[%s0 + $0x4b0] sm:$0xff]
    %v169 = vld [vmem:[%s0 + $0x4b8] sm:$0xff]
    %v170 = vld [vmem:[%s0 + $0x4c0] sm:$0xff]
    %v171 = vld [vmem:[%s0 + $0x4c8] sm:$0xff]
    %v172 = vld [vmem:[%s0 + $0x4d0] sm:$0xff]
    %v173 = vld [vmem:[%s0 + $0x4d8] sm:$0xff]
    %v174 = vld [vmem:[%s0 + $0x4e0] sm:$0xff]
    %v175 = vld [vmem:[%s0 + $0x4e8] sm:$0xff]
    %v176 = vld [vmem:[%s0 + $0x4f0] sm:$0xff]
    %v177 = vld [vmem:[%s0 + $0x4f8] sm:$0xff]
    %v178 = vld [vmem:[%s0 + $0x500] sm:$0xff]
    %v179 = vld [vmem:[%s0 + $0x508] sm:$0xff]
    %v180 = vld [vmem:[%s0 + $0x510] sm:$0xff]
    %v181 = vld [vmem:[%s0 + $0x518] sm:$0xff]
    %v182 = vld [vmem:[%s0 + $0x520] sm:$0xff]
    %v183 = vld [vmem:[%s0 + $0x528] sm:$0xff]
    %v184 = vld [vmem:[%s0 + $0x530] sm:$0xff]
    %v185 = vld [vmem:[%s0 + $0x538] sm:$0xff]
    %v186 = vld [vmem:[%s0 + $0x540] sm:$0xff]
    %v187 = vld [vmem:[%s0 + $0x548] sm:$0xff]
    %v188 = vld [vmem:[%s0 + $0x550] sm:$0xff]
    %v189 = vld [vmem:[%s0 + $0x558] sm:$0xff]
    %v190 = vld [vmem:[%s0 + $0x560] sm:$0xff]
    %v191 = vld [vmem:[%s0 + $0x568] sm:$0xff]
    %v192 = vld [vmem:[%s0 + $0x570] sm:$0xff]
    %v193 = vld [vmem:[%s0 + $0x578] sm:$0xff]
    %v194 = vld [vmem:[%s0 + $0x580] sm:$0xff]
    %v195 = vld [vmem:[%s0 + $0x588] sm:$0xff]
    %v196 = vld [vmem:[%s0 + $0x590] sm:$0xff]
    %v197 = vld [vmem:[%s0 + $0x598] sm:$0xff]
    %v198 = vld [vmem:[%s0 + $0x5a0] sm:$0xff]
    %v199 = vld [vmem:[%s0 + $0x5a8] sm:$0xff]
    %v200 = vld [vmem:[%s0 + $0x5b0] sm:$0xff]
    %v201 = vld [vmem:[%s0 + $0x5b8] sm:$0xff]
    %v202 = vld [vmem:[%s0 + $0x5c0] sm:$0xff]
    %v203 = vld [vmem:[%s0 + $0x5c8] sm:$0xff]
    %v204 = vld [vmem:[%s0 + $0x5d0] sm:$0xff]
    %v205 = vld [vmem:[%s0 + $0x5d8] sm:$0xff]
    %v206 = vld [vmem:[%s0 + $0x5e0] sm:$0xff]
    %v207 = vld [vmem:[%s0 + $0x5e8] sm:$0xff]
    %v208 = vld [vmem:[%s0 + $0x5f0] sm:$0xff]
    %v209 = vld [vmem:[%s0 + $0x5f8] sm:$0xff]
    %v210 = vld [vmem:[%s0 + $0x600] sm:$0xff]
    %v211 = vld [vmem:[%s0 + $0x608] sm:$0xff]
    %v212 = vld [vmem:[%s0 + $0x610] sm:$0xff]
    %v213 = vld [vmem:[%s0 + $0x618] sm:$0xff]
    %v214 = vld [vmem:[%s0 + $0x620] sm:$0xff]
    %v215 = vld [vmem:[%s0 + $0x628] sm:$0xff]
    %v216 = vld [vmem:[%s0 + $0x630] sm:$0xff]
    %v217 = vld [vmem:[%s0 + $0x638] sm:$0xff]
    %v218 = vld [vmem:[%s0 + $0x640] sm:$0xff]
    %v219 = vld [vmem:[%s0 + $0x648] sm:$0xff]
    %v220 = vld [vmem:[%s0 + $0x650] sm:$0xff]
    %v221 = vld [vmem:[%s0 + $0x658] sm:$0xff]
    %v222 = vld [vmem:[%s0 + $0x660] sm:$0xff]
    %v223 = vld [vmem:[%s0 + $0x668] sm:$0xff]
    %v224 = vld [vmem:[%s0 + $0x670] sm:$0xff]
    %v225 = vld [vmem:[%s0 + $0x678] sm:$0xff]
    %v226 = vld [vmem:[%s0 + $0x680] sm:$0xff]
    %v227 = vld [vmem:[%s0 + $0x688] sm:$0xff]
    %v228 = vld [vmem:[%s0 + $0x690] sm:$0xff]
    %v229 = vld [vmem:[%s0 + $0x698] sm:$0xff]
    %v230 = vld [vmem:[%s0 + $0x6a0] sm:$0xff]
    %v231 = vld [vmem:[%s0 + $0x6a8] sm:$0xff]
    %v232 = vld [vmem:[%s0 + $0x6b0] sm:$0xff]
    %v233 = vld [vmem:[%s0 + $0x6b8] sm:$0xff]
    %v234 = vld [vmem:[%s0 + $0x6c0] sm:$0xff]
    %v235 = vld [vmem:[%s0 + $0x6c8] sm:$0xff]
    %v236 = vld [vmem:[%s0 + $0x6d0] sm:$0xff]
    %v237 = vld [vmem:[%s0 + $0x6d8] sm:$0xff]
    %v238 = vld [vmem:[%s0 + $0x6e0] sm:$0xff]
    %v239 = vld [vmem:[%s0 + $0x6e8] sm:$0xff]
    %v240 = vld [vmem:[%s0 + $0x6f0] sm:$0xff]
    %v241 = vld [vmem:[%s0 + $0x6f8] sm:$0xff]
    %v242 = vld [vmem:[%s0 + $0x700] sm:$0xff]
    %v243 = vld [vmem:[%s0 + $0x708] sm:$0xff]
    %v244 = vld [vmem:[%s0 + $0x710] sm:$0xff]
    %v245 = vld [vmem:[%s0 + $0x718] sm:$0xff]
    %v246 = vld [vmem:[%s0 + $0x720] sm:$0xff]
    %v247 = vld [vmem:[%s0 + $0x728] sm:$0xff]
    %v248 = vld [vmem:[%s0 + $0x730] sm:$0xff]
    %v249 = vld [vmem:[%s0 + $0x738] sm:$0xff]
    %v250 = vld [vmem:[%s0 + $0x740] sm:$0xff]
    %v251 = vld [vmem:[%s0 + $0x748] sm:$0xff]
    %v252 = vld [vmem:[%s0 + $0x750] sm:$0xff]
    %v253 = vld [vmem:[%s0 + $0x758] sm:$0xff]
    %v254 = vld [vmem:[%s0 + $0x760] sm:$0xff]
    %v255 = vld [vmem:[%s0 + $0x768] sm:$0xff]
    %v256 = vld [vmem:[%s0 + $0x770] sm:$0xff]
    %v257 = vld [vmem:[%s0 + $0x778] sm:$0xff]
    %v258 = vld [vmem:[%s0 + $0x780] sm:$0xff]
    %v259 = vld [vmem:[%s0 + $0x788] sm:$0xff]
    %v260 = vld [vmem:[%s0 + $0x790] sm:$0xff]
    %v261 = vld [vmem:[%s0 + $0x798] sm:$0xff]
    %v262 = vld [vmem:[%s0 + $0x7a0] sm:$0xff]
    %v263 = vld [vmem:[%s0 + $0x7a8] sm:$0xff]
    %v264 = vld [vmem:[%s0 + $0x7b0] sm:$0xff]
    %v265 = vld [vmem:[%s0 + $0x7b8] sm:$0xff]
    %v266 = vld [vmem:[%s0 + $0x7c0] sm:$0xff]
    %v267 = vld [vmem:[%s0 + $0x7c8] sm:$0xff]
    %v268 = vld [vmem:[%s0 + $0x7d0] sm:$0xff]
    %v269 = vld [vmem:[%s0 + $0x7d8] sm:$0xff]
    %v270 = vld [vmem:[%s0 + $0x7e0] sm:$0xff]
    %v271 = vld [vmem:[%s0 + $0x7e8] sm:$0xff]
    %v272 = vld [vmem:[%s0 + $0x7f0] sm:$0xff]
    %v273 = vld [vmem:[%s0 + $0x7f8] sm:$0xff]
    %v274 = vld [vmem:[%s1] sm:$0xff]
    %v275 = vld [vmem:[%s1 + $0x8] sm:$0xff]
    %v276 = vld [vmem:[%s1 + $0x10] sm:$0xff]
    %v277 = vld [vmem:[%s1 + $0x18] sm:$0xff]
    %v278 = vld [vmem:[%s1 + $0x20] sm:$0xff]
    %v279 = vld [vmem:[%s1 + $0x28] sm:$0xff]
    %v280 = vld [vmem:[%s1 + $0x30] sm:$0xff]
    %v281 = vld [vmem:[%s1 + $0x38] sm:$0xff]
    %v282 = vld [vmem:[%s1 + $0x40] sm:$0xff]
    %v283 = vld [vmem:[%s1 + $0x48] sm:$0xff]
    %v284 = vld [vmem:[%s1 + $0x50] sm:$0xff]
    %v285 = vld [vmem:[%s1 + $0x58] sm:$0xff]
    %v286 = vld [vmem:[%s1 + $0x60] sm:$0xff]
    %v287 = vld [vmem:[%s1 + $0x68] sm:$0xff]
    %v288 = vld [vmem:[%s1 + $0x70] sm:$0xff]
    %v289 = vld [vmem:[%s1 + $0x78] sm:$0xff]
    %v290 = vld [vmem:[%s1 + $0x80] sm:$0xff]
    %v291 = vld [vmem:[%s1 + $0x88] sm:$0xff]
    %v292 = vld [vmem:[%s1 + $0x90] sm:$0xff]
    %v293 = vld [vmem:[%s1 + $0x98] sm:$0xff]
    %v294 = vld [vmem:[%s1 + $0xa0] sm:$0xff]
    %v295 = vld [vmem:[%s1 + $0xa8] sm:$0xff]
    %v296 = vld [vmem:[%s1 + $0xb0] sm:$0xff]
    %v297 = vld [vmem:[%s1 + $0xb8] sm:$0xff]
    %v298 = vld [vmem:[%s1 + $0xc0] sm:$0xff]
    %v299 = vld [vmem:[%s1 + $0xc8] sm:$0xff]
    %v300 = vld [vmem:[%s1 + $0xd0] sm:$0xff]
    %v301 = vld [vmem:[%s1 + $0xd8] sm:$0xff]
    %v302 = vld [vmem:[%s1 + $0xe0] sm:$0xff]
    %v303 = vld [vmem:[%s1 + $0xe8] sm:$0xff]
    %v304 = vld [vmem:[%s1 + $0xf0] sm:$0xff]
    %v305 = vld [vmem:[%s1 + $0xf8] sm:$0xff]
    %v306 = vld [vmem:[%s1 + $0x100] sm:$0xff]
    %v307 = vld [vmem:[%s1 + $0x108] sm:$0xff]
    %v308 = vld [vmem:[%s1 + $0x110] sm:$0xff]
    %v309 = vld [vmem:[%s1 + $0x118] sm:$0xff]
    %v310 = vld [vmem:[%s1 + $0x120] sm:$0xff]
    %v311 = vld [vmem:[%s1 + $0x128] sm:$0xff]
    %v312 = vld [vmem:[%s1 + $0x130] sm:$0xff]
    %v313 = vld [vmem:[%s1 + $0x138] sm:$0xff]
    %v314 = vld [vmem:[%s1 + $0x140] sm:$0xff]
    %v315 = vld [vmem:[%s1 + $0x148] sm:$0xff]
    %v316 = vld [vmem:[%s1 + $0x150] sm:$0xff]
    %v317 = vld [vmem:[%s1 + $0x158] sm:$0xff]
    %v318 = vld [vmem:[%s1 + $0x160] sm:$0xff]
    %v319 = vld [vmem:[%s1 + $0x168] sm:$0xff]
    %v320 = vld [vmem:[%s1 + $0x170] sm:$0xff]
    %v321 = vld [vmem:[%s1 + $0x178] sm:$0xff]
    %v322 = vld [vmem:[%s1 + $0x180] sm:$0xff]
    %v323 = vld [vmem:[%s1 + $0x188] sm:$0xff]
    %v324 = vld [vmem:[%s1 + $0x190] sm:$0xff]
    %v325 = vld [vmem:[%s1 + $0x198] sm:$0xff]
    %v326 = vld [vmem:[%s1 + $0x1a0] sm:$0xff]
    %v327 = vld [vmem:[%s1 + $0x1a8] sm:$0xff]
    %v328 = vld [vmem:[%s1 + $0x1b0] sm:$0xff]
    %v329 = vld [vmem:[%s1 + $0x1b8] sm:$0xff]
    %v330 = vld [vmem:[%s1 + $0x1c0] sm:$0xff]
    %v331 = vld [vmem:[%s1 + $0x1c8] sm:$0xff]
    %v332 = vld [vmem:[%s1 + $0x1d0] sm:$0xff]
    %v333 = vld [vmem:[%s1 + $0x1d8] sm:$0xff]
    %v334 = vld [vmem:[%s1 + $0x1e0] sm:$0xff]
    %v335 = vld [vmem:[%s1 + $0x1e8] sm:$0xff]
    %v336 = vld [vmem:[%s1 + $0x1f0] sm:$0xff]
    %v337 = vld [vmem:[%s1 + $0x1f8] sm:$0xff]
    %v338 = vld [vmem:[%s1 + $0x200] sm:$0xff]
    %v339 = vld [vmem:[%s1 + $0x208] sm:$0xff]
    %v340 = vld [vmem:[%s1 + $0x210] sm:$0xff]
    %v341 = vld [vmem:[%s1 + $0x218] sm:$0xff]
    %v342 = vld [vmem:[%s1 + $0x220] sm:$0xff]
    %v343 = vld [vmem:[%s1 + $0x228] sm:$0xff]
    %v344 = vld [vmem:[%s1 + $0x230] sm:$0xff]
    %v345 = vld [vmem:[%s1 + $0x238] sm:$0xff]
    %v346 = vld [vmem:[%s1 + $0x240] sm:$0xff]
    %v347 = vld [vmem:[%s1 + $0x248] sm:$0xff]
    %v348 = vld [vmem:[%s1 + $0x250] sm:$0xff]
    %v349 = vld [vmem:[%s1 + $0x258] sm:$0xff]
    %v350 = vld [vmem:[%s1 + $0x260] sm:$0xff]
    %v351 = vld [vmem:[%s1 + $0x268] sm:$0xff]
    %v352 = vld [vmem:[%s1 + $0x270] sm:$0xff]
    %v353 = vld [vmem:[%s1 + $0x278] sm:$0xff]
    %v354 = vld [vmem:[%s1 + $0x280] sm:$0xff]
    %v355 = vld [vmem:[%s1 + $0x288] sm:$0xff]
    %v356 = vld [vmem:[%s1 + $0x290] sm:$0xff]
    %v357 = vld [vmem:[%s1 + $0x298] sm:$0xff]
    %v358 = vld [vmem:[%s1 + $0x2a0] sm:$0xff]
    %v359 = vld [vmem:[%s1 + $0x2a8] sm:$0xff]
    %v360 = vld [vmem:[%s1 + $0x2b0] sm:$0xff]
    %v361 = vld [vmem:[%s1 + $0x2b8] sm:$0xff]
    %v362 = vld [vmem:[%s1 + $0x2c0] sm:$0xff]
    %v363 = vld [vmem:[%s1 + $0x2c8] sm:$0xff]
    %v364 = vld [vmem:[%s1 + $0x2d0] sm:$0xff]
    %v365 = vld [vmem:[%s1 + $0x2d8] sm:$0xff]
    %v366 = vld [vmem:[%s1 + $0x2e0] sm:$0xff]
    %v367 = vld [vmem:[%s1 + $0x2e8] sm:$0xff]
    %v368 = vld [vmem:[%s1 + $0x2f0] sm:$0xff]
    %v369 = vld [vmem:[%s1 + $0x2f8] sm:$0xff]
    %v370 = vld [vmem:[%s1 + $0x300] sm:$0xff]
    %v371 = vld [vmem:[%s1 + $0x308] sm:$0xff]
    %v372 = vld [vmem:[%s1 + $0x310] sm:$0xff]
    %v373 = vld [vmem:[%s1 + $0x318] sm:$0xff]
    %v374 = vld [vmem:[%s1 + $0x320] sm:$0xff]
    %v375 = vld [vmem:[%s1 + $0x328] sm:$0xff]
    %v376 = vld [vmem:[%s1 + $0x330] sm:$0xff]
    %v377 = vld [vmem:[%s1 + $0x338] sm:$0xff]
    %v378 = vld [vmem:[%s1 + $0x340] sm:$0xff]
    %v379 = vld [vmem:[%s1 + $0x348] sm:$0xff]
    %v380 = vld [vmem:[%s1 + $0x350] sm:$0xff]
    %v381 = vld [vmem:[%s1 + $0x358] sm:$0xff]
    %v382 = vld [vmem:[%s1 + $0x360] sm:$0xff]
    %v383 = vld [vmem:[%s1 + $0x368] sm:$0xff]
    %v384 = vld [vmem:[%s1 + $0x370] sm:$0xff]
    %v385 = vld [vmem:[%s1 + $0x378] sm:$0xff]
    %v386 = vld [vmem:[%s1 + $0x380] sm:$0xff]
    %v387 = vld [vmem:[%s1 + $0x388] sm:$0xff]
    %v388 = vld [vmem:[%s1 + $0x390] sm:$0xff]
    %v389 = vld [vmem:[%s1 + $0x398] sm:$0xff]
    %v390 = vld [vmem:[%s1 + $0x3a0] sm:$0xff]
    %v391 = vld [vmem:[%s1 + $0x3a8] sm:$0xff]
    %v392 = vld [vmem:[%s1 + $0x3b0] sm:$0xff]
    %v393 = vld [vmem:[%s1 + $0x3b8] sm:$0xff]
    %v394 = vld [vmem:[%s1 + $0x3c0] sm:$0xff]
    %v395 = vld [vmem:[%s1 + $0x3c8] sm:$0xff]
    %v396 = vld [vmem:[%s1 + $0x3d0] sm:$0xff]
    %v397 = vld [vmem:[%s1 + $0x3d8] sm:$0xff]
    %v398 = vld [vmem:[%s1 + $0x3e0] sm:$0xff]
    %v399 = vld [vmem:[%s1 + $0x3e8] sm:$0xff]
    %v400 = vld [vmem:[%s1 + $0x3f0] sm:$0xff]
    %v401 = vld [vmem:[%s1 + $0x3f8] sm:$0xff]
    %v402 = vld [vmem:[%s1 + $0x400] sm:$0xff]
    %v403 = vld [vmem:[%s1 + $0x408] sm:$0xff]
    %v404 = vld [vmem:[%s1 + $0x410] sm:$0xff]
    %v405 = vld [vmem:[%s1 + $0x418] sm:$0xff]
    %v406 = vld [vmem:[%s1 + $0x420] sm:$0xff]
    %v407 = vld [vmem:[%s1 + $0x428] sm:$0xff]
    %v408 = vld [vmem:[%s1 + $0x430] sm:$0xff]
    %v409 = vld [vmem:[%s1 + $0x438] sm:$0xff]
    %v410 = vld [vmem:[%s1 + $0x440] sm:$0xff]
    %v411 = vld [vmem:[%s1 + $0x448] sm:$0xff]
    %v412 = vld [vmem:[%s1 + $0x450] sm:$0xff]
    %v413 = vld [vmem:[%s1 + $0x458] sm:$0xff]
    %v414 = vld [vmem:[%s1 + $0x460] sm:$0xff]
    %v415 = vld [vmem:[%s1 + $0x468] sm:$0xff]
    %v416 = vld [vmem:[%s1 + $0x470] sm:$0xff]
    %v417 = vld [vmem:[%s1 + $0x478] sm:$0xff]
    %v418 = vld [vmem:[%s1 + $0x480] sm:$0xff]
    %v419 = vld [vmem:[%s1 + $0x488] sm:$0xff]
    %v420 = vld [vmem:[%s1 + $0x490] sm:$0xff]
    %v421 = vld [vmem:[%s1 + $0x498] sm:$0xff]
    %v422 = vld [vmem:[%s1 + $0x4a0] sm:$0xff]
    %v423 = vld [vmem:[%s1 + $0x4a8] sm:$0xff]
    %v424 = vld [vmem:[%s1 + $0x4b0] sm:$0xff]
    %v425 = vld [vmem:[%s1 + $0x4b8] sm:$0xff]
    %v426 = vld [vmem:[%s1 + $0x4c0] sm:$0xff]
    %v427 = vld [vmem:[%s1 + $0x4c8] sm:$0xff]
    %v428 = vld [vmem:[%s1 + $0x4d0] sm:$0xff]
    %v429 = vld [vmem:[%s1 + $0x4d8] sm:$0xff]
    %v430 = vld [vmem:[%s1 + $0x4e0] sm:$0xff]
    %v431 = vld [vmem:[%s1 + $0x4e8] sm:$0xff]
    %v432 = vld [vmem:[%s1 + $0x4f0] sm:$0xff]
    %v433 = vld [vmem:[%s1 + $0x4f8] sm:$0xff]
    %v434 = vld [vmem:[%s1 + $0x500] sm:$0xff]
    %v435 = vld [vmem:[%s1 + $0x508] sm:$0xff]
    %v436 = vld [vmem:[%s1 + $0x510] sm:$0xff]
    %v437 = vld [vmem:[%s1 + $0x518] sm:$0xff]
    %v438 = vld [vmem:[%s1 + $0x520] sm:$0xff]
    %v439 = vld [vmem:[%s1 + $0x528] sm:$0xff]
    %v440 = vld [vmem:[%s1 + $0x530] sm:$0xff]
    %v441 = vld [vmem:[%s1 + $0x538] sm:$0xff]
    %v442 = vld [vmem:[%s1 + $0x540] sm:$0xff]
    %v443 = vld [vmem:[%s1 + $0x548] sm:$0xff]
    %v444 = vld [vmem:[%s1 + $0x550] sm:$0xff]
    %v445 = vld [vmem:[%s1 + $0x558] sm:$0xff]
    %v446 = vld [vmem:[%s1 + $0x560] sm:$0xff]
    %v447 = vld [vmem:[%s1 + $0x568] sm:$0xff]
    %v448 = vld [vmem:[%s1 + $0x570] sm:$0xff]
    %v449 = vld [vmem:[%s1 + $0x578] sm:$0xff]
    %v450 = vld [vmem:[%s1 + $0x580] sm:$0xff]
    %v451 = vld [vmem:[%s1 + $0x588] sm:$0xff]
    %v452 = vld [vmem:[%s1 + $0x590] sm:$0xff]
    %v453 = vld [vmem:[%s1 + $0x598] sm:$0xff]
    %v454 = vld [vmem:[%s1 + $0x5a0] sm:$0xff]
    %v455 = vld [vmem:[%s1 + $0x5a8] sm:$0xff]
    %v456 = vld [vmem:[%s1 + $0x5b0] sm:$0xff]
    %v457 = vld [vmem:[%s1 + $0x5b8] sm:$0xff]
    %v458 = vld [vmem:[%s1 + $0x5c0] sm:$0xff]
    %v459 = vld [vmem:[%s1 + $0x5c8] sm:$0xff]
    %v460 = vld [vmem:[%s1 + $0x5d0] sm:$0xff]
    %v461 = vld [vmem:[%s1 + $0x5d8] sm:$0xff]
    %v462 = vld [vmem:[%s1 + $0x5e0] sm:$0xff]
    %v463 = vld [vmem:[%s1 + $0x5e8] sm:$0xff]
    %v464 = vld [vmem:[%s1 + $0x5f0] sm:$0xff]
    %v465 = vld [vmem:[%s1 + $0x5f8] sm:$0xff]
    %v466 = vld [vmem:[%s1 + $0x600] sm:$0xff]
    %v467 = vld [vmem:[%s1 + $0x608] sm:$0xff]
    %v468 = vld [vmem:[%s1 + $0x610] sm:$0xff]
    %v469 = vld [vmem:[%s1 + $0x618] sm:$0xff]
    %v470 = vld [vmem:[%s1 + $0x620] sm:$0xff]
    %v471 = vld [vmem:[%s1 + $0x628] sm:$0xff]
    %v472 = vld [vmem:[%s1 + $0x630] sm:$0xff]
    %v473 = vld [vmem:[%s1 + $0x638] sm:$0xff]
    %v474 = vld [vmem:[%s1 + $0x640] sm:$0xff]
    %v475 = vld [vmem:[%s1 + $0x648] sm:$0xff]
    %v476 = vld [vmem:[%s1 + $0x650] sm:$0xff]
    %v477 = vld [vmem:[%s1 + $0x658] sm:$0xff]
    %v478 = vld [vmem:[%s1 + $0x660] sm:$0xff]
    %v479 = vld [vmem:[%s1 + $0x668] sm:$0xff]
    %v480 = vld [vmem:[%s1 + $0x670] sm:$0xff]
    %v481 = vld [vmem:[%s1 + $0x678] sm:$0xff]
    %v482 = vld [vmem:[%s1 + $0x680] sm:$0xff]
    %v483 = vld [vmem:[%s1 + $0x688] sm:$0xff]
    %v484 = vld [vmem:[%s1 + $0x690] sm:$0xff]
    %v485 = vld [vmem:[%s1 + $0x698] sm:$0xff]
    %v486 = vld [vmem:[%s1 + $0x6a0] sm:$0xff]
    %v487 = vld [vmem:[%s1 + $0x6a8] sm:$0xff]
    %v488 = vld [vmem:[%s1 + $0x6b0] sm:$0xff]
    %v489 = vld [vmem:[%s1 + $0x6b8] sm:$0xff]
    %v490 = vld [vmem:[%s1 + $0x6c0] sm:$0xff]
    %v491 = vld [vmem:[%s1 + $0x6c8] sm:$0xff]
    %v492 = vld [vmem:[%s1 + $0x6d0] sm:$0xff]
    %v493 = vld [vmem:[%s1 + $0x6d8] sm:$0xff]
    %v494 = vld [vmem:[%s1 + $0x6e0] sm:$0xff]
    %v495 = vld [vmem:[%s1 + $0x6e8] sm:$0xff]
    %v496 = vld [vmem:[%s1 + $0x6f0] sm:$0xff]
    %v497 = vld [vmem:[%s1 + $0x6f8] sm:$0xff]
    %v498 = vld [vmem:[%s1 + $0x700] sm:$0xff]
    %v499 = vld [vmem:[%s1 + $0x708] sm:$0xff]
    %v500 = vld [vmem:[%s1 + $0x710] sm:$0xff]
    %v501 = vld [vmem:[%s1 + $0x718] sm:$0xff]
    %v502 = vld [vmem:[%s1 + $0x720] sm:$0xff]
    %v503 = vld [vmem:[%s1 + $0x728] sm:$0xff]
    %v504 = vld [vmem:[%s1 + $0x730] sm:$0xff]
    %v505 = vld [vmem:[%s1 + $0x738] sm:$0xff]
    %v506 = vld [vmem:[%s1 + $0x740] sm:$0xff]
    %v507 = vld [vmem:[%s1 + $0x748] sm:$0xff]
    %v508 = vld [vmem:[%s1 + $0x750] sm:$0xff]
    %v509 = vld [vmem:[%s1 + $0x758] sm:$0xff]
    %v510 = vld [vmem:[%s1 + $0x760] sm:$0xff]
    %v511 = vld [vmem:[%s1 + $0x768] sm:$0xff]
    %v512 = vld [vmem:[%s1 + $0x770] sm:$0xff]
    %v513 = vld [vmem:[%s1 + $0x778] sm:$0xff]
    %v514 = vld [vmem:[%s1 + $0x780] sm:$0xff]
    %v515 = vld [vmem:[%s1 + $0x788] sm:$0xff]
    %v516 = vld [vmem:[%s1 + $0x790] sm:$0xff]
    %v517 = vld [vmem:[%s1 + $0x798] sm:$0xff]
    %v518 = vld [vmem:[%s1 + $0x7a0] sm:$0xff]
    %v519 = vld [vmem:[%s1 + $0x7a8] sm:$0xff]
    %v520 = vld [vmem:[%s1 + $0x7b0] sm:$0xff]
    %v521 = vld [vmem:[%s1 + $0x7b8] sm:$0xff]
    %v522 = vld [vmem:[%s1 + $0x7c0] sm:$0xff]
    %v523 = vld [vmem:[%s1 + $0x7c8] sm:$0xff]
    %v524 = vld [vmem:[%s1 + $0x7d0] sm:$0xff]
    %v525 = vld [vmem:[%s1 + $0x7d8] sm:$0xff]
    %v526 = vld [vmem:[%s1 + $0x7e0] sm:$0xff]
    %v527 = vld [vmem:[%s1 + $0x7e8] sm:$0xff]
    %v528 = vld [vmem:[%s1 + $0x7f0] sm:$0xff]
    %v529 = vld [vmem:[%s1 + $0x7f8] sm:$0xff]
    %v530 = vsub.f32 %v18, %v274
    %v531 = vsub.f32 %v19, %v275
    %v532 = vsub.f32 %v20, %v276
    %v533 = vsub.f32 %v21, %v277
    %v534 = vsub.f32 %v22, %v278
    %v535 = vsub.f32 %v23, %v279
    %v536 = vsub.f32 %v24, %v280
    %v537 = vsub.f32 %v25, %v281
    %v538 = vsub.f32 %v26, %v282
    %v539 = vsub.f32 %v27, %v283
    %v540 = vsub.f32 %v28, %v284
    %v541 = vsub.f32 %v29, %v285
    %v542 = vsub.f32 %v30, %v286
    %v543 = vsub.f32 %v31, %v287
    %v544 = vsub.f32 %v32, %v288
    %v545 = vsub.f32 %v33, %v289
    %v546 = vsub.f32 %v34, %v290
    %v547 = vsub.f32 %v35, %v291
    %v548 = vsub.f32 %v36, %v292
    %v549 = vsub.f32 %v37, %v293
    %v550 = vsub.f32 %v38, %v294
    %v551 = vsub.f32 %v39, %v295
    %v552 = vsub.f32 %v40, %v296
    %v553 = vsub.f32 %v41, %v297
    %v554 = vsub.f32 %v42, %v298
    %v555 = vsub.f32 %v43, %v299
    %v556 = vsub.f32 %v44, %v300
    %v557 = vsub.f32 %v45, %v301
    %v558 = vsub.f32 %v46, %v302
    %v559 = vsub.f32 %v47, %v303
    %v560 = vsub.f32 %v48, %v304
    %v561 = vsub.f32 %v49, %v305
    %v562 = vsub.f32 %v50, %v306
    %v563 = vsub.f32 %v51, %v307
    %v564 = vsub.f32 %v52, %v308
    %v565 = vsub.f32 %v53, %v309
    %v566 = vsub.f32 %v54, %v310
    %v567 = vsub.f32 %v55, %v311
    %v568 = vsub.f32 %v56, %v312
    %v569 = vsub.f32 %v57, %v313
    %v570 = vsub.f32 %v58, %v314
    %v571 = vsub.f32 %v59, %v315
    %v572 = vsub.f32 %v60, %v316
    %v573 = vsub.f32 %v61, %v317
    %v574 = vsub.f32 %v62, %v318
    %v575 = vsub.f32 %v63, %v319
    %v576 = vsub.f32 %v64, %v320
    %v577 = vsub.f32 %v65, %v321
    %v578 = vsub.f32 %v66, %v322
    %v579 = vsub.f32 %v67, %v323
    %v580 = vsub.f32 %v68, %v324
    %v581 = vsub.f32 %v69, %v325
    %v582 = vsub.f32 %v70, %v326
    %v583 = vsub.f32 %v71, %v327
    %v584 = vsub.f32 %v72, %v328
    %v585 = vsub.f32 %v73, %v329
    %v586 = vsub.f32 %v74, %v330
    %v587 = vsub.f32 %v75, %v331
    %v588 = vsub.f32 %v76, %v332
    %v589 = vsub.f32 %v77, %v333
    %v590 = vsub.f32 %v78, %v334
    %v591 = vsub.f32 %v79, %v335
    %v592 = vsub.f32 %v80, %v336
    %v593 = vsub.f32 %v81, %v337
    %v594 = vsub.f32 %v82, %v338
    %v595 = vsub.f32 %v83, %v339
    %v596 = vsub.f32 %v84, %v340
    %v597 = vsub.f32 %v85, %v341
    %v598 = vsub.f32 %v86, %v342
    %v599 = vsub.f32 %v87, %v343
    %v600 = vsub.f32 %v88, %v344
    %v601 = vsub.f32 %v89, %v345
    %v602 = vsub.f32 %v90, %v346
    %v603 = vsub.f32 %v91, %v347
    %v604 = vsub.f32 %v92, %v348
    %v605 = vsub.f32 %v93, %v349
    %v606 = vsub.f32 %v94, %v350
    %v607 = vsub.f32 %v95, %v351
    %v608 = vsub.f32 %v96, %v352
    %v609 = vsub.f32 %v97, %v353
    %v610 = vsub.f32 %v98, %v354
    %v611 = vsub.f32 %v99, %v355
    %v612 = vsub.f32 %v100, %v356
    %v613 = vsub.f32 %v101, %v357
    %v614 = vsub.f32 %v102, %v358
    %v615 = vsub.f32 %v103, %v359
    %v616 = vsub.f32 %v104, %v360
    %v617 = vsub.f32 %v105, %v361
    %v618 = vsub.f32 %v106, %v362
    %v619 = vsub.f32 %v107, %v363
    %v620 = vsub.f32 %v108, %v364
    %v621 = vsub.f32 %v109, %v365
    %v622 = vsub.f32 %v110, %v366
    %v623 = vsub.f32 %v111, %v367
    %v624 = vsub.f32 %v112, %v368
    %v625 = vsub.f32 %v113, %v369
    %v626 = vsub.f32 %v114, %v370
    %v627 = vsub.f32 %v115, %v371
    %v628 = vsub.f32 %v116, %v372
    %v629 = vsub.f32 %v117, %v373
    %v630 = vsub.f32 %v118, %v374
    %v631 = vsub.f32 %v119, %v375
    %v632 = vsub.f32 %v120, %v376
    %v633 = vsub.f32 %v121, %v377
    %v634 = vsub.f32 %v122, %v378
    %v635 = vsub.f32 %v123, %v379
    %v636 = vsub.f32 %v124, %v380
    %v637 = vsub.f32 %v125, %v381
    %v638 = vsub.f32 %v126, %v382
    %v639 = vsub.f32 %v127, %v383
    %v640 = vsub.f32 %v128, %v384
    %v641 = vsub.f32 %v129, %v385
    %v642 = vsub.f32 %v130, %v386
    %v643 = vsub.f32 %v131, %v387
    %v644 = vsub.f32 %v132, %v388
    %v645 = vsub.f32 %v133, %v389
    %v646 = vsub.f32 %v134, %v390
    %v647 = vsub.f32 %v135, %v391
    %v648 = vsub.f32 %v136, %v392
    %v649 = vsub.f32 %v137, %v393
    %v650 = vsub.f32 %v138, %v394
    %v651 = vsub.f32 %v139, %v395
    %v652 = vsub.f32 %v140, %v396
    %v653 = vsub.f32 %v141, %v397
    %v654 = vsub.f32 %v142, %v398
    %v655 = vsub.f32 %v143, %v399
    %v656 = vsub.f32 %v144, %v400
    %v657 = vsub.f32 %v145, %v401
    %v658 = vsub.f32 %v146, %v402
    %v659 = vsub.f32 %v147, %v403
    %v660 = vsub.f32 %v148, %v404
    %v661 = vsub.f32 %v149, %v405
    %v662 = vsub.f32 %v150, %v406
    %v663 = vsub.f32 %v151, %v407
    %v664 = vsub.f32 %v152, %v408
    %v665 = vsub.f32 %v153, %v409
    %v666 = vsub.f32 %v154, %v410
    %v667 = vsub.f32 %v155, %v411
    %v668 = vsub.f32 %v156, %v412
    %v669 = vsub.f32 %v157, %v413
    %v670 = vsub.f32 %v158, %v414
    %v671 = vsub.f32 %v159, %v415
    %v672 = vsub.f32 %v160, %v416
    %v673 = vsub.f32 %v161, %v417
    %v674 = vsub.f32 %v162, %v418
    %v675 = vsub.f32 %v163, %v419
    %v676 = vsub.f32 %v164, %v420
    %v677 = vsub.f32 %v165, %v421
    %v678 = vsub.f32 %v166, %v422
    %v679 = vsub.f32 %v167, %v423
    %v680 = vsub.f32 %v168, %v424
    %v681 = vsub.f32 %v169, %v425
    %v682 = vsub.f32 %v170, %v426
    %v683 = vsub.f32 %v171, %v427
    %v684 = vsub.f32 %v172, %v428
    %v685 = vsub.f32 %v173, %v429
    %v686 = vsub.f32 %v174, %v430
    %v687 = vsub.f32 %v175, %v431
    %v688 = vsub.f32 %v176, %v432
    %v689 = vsub.f32 %v177, %v433
    %v690 = vsub.f32 %v178, %v434
    %v691 = vsub.f32 %v179, %v435
    %v692 = vsub.f32 %v180, %v436
    %v693 = vsub.f32 %v181, %v437
    %v694 = vsub.f32 %v182, %v438
    %v695 = vsub.f32 %v183, %v439
    %v696 = vsub.f32 %v184, %v440
    %v697 = vsub.f32 %v185, %v441
    %v698 = vsub.f32 %v186, %v442
    %v699 = vsub.f32 %v187, %v443
    %v700 = vsub.f32 %v188, %v444
    %v701 = vsub.f32 %v189, %v445
    %v702 = vsub.f32 %v190, %v446
    %v703 = vsub.f32 %v191, %v447
    %v704 = vsub.f32 %v192, %v448
    %v705 = vsub.f32 %v193, %v449
    %v706 = vsub.f32 %v194, %v450
    %v707 = vsub.f32 %v195, %v451
    %v708 = vsub.f32 %v196, %v452
    %v709 = vsub.f32 %v197, %v453
    %v710 = vsub.f32 %v198, %v454
    %v711 = vsub.f32 %v199, %v455
    %v712 = vsub.f32 %v200, %v456
    %v713 = vsub.f32 %v201, %v457
    %v714 = vsub.f32 %v202, %v458
    %v715 = vsub.f32 %v203, %v459
    %v716 = vsub.f32 %v204, %v460
    %v717 = vsub.f32 %v205, %v461
    %v718 = vsub.f32 %v206, %v462
    %v719 = vsub.f32 %v207, %v463
    %v720 = vsub.f32 %v208, %v464
    %v721 = vsub.f32 %v209, %v465
    %v722 = vsub.f32 %v210, %v466
    %v723 = vsub.f32 %v211, %v467
    %v724 = vsub.f32 %v212, %v468
    %v725 = vsub.f32 %v213, %v469
    %v726 = vsub.f32 %v214, %v470
    %v727 = vsub.f32 %v215, %v471
    %v728 = vsub.f32 %v216, %v472
    %v729 = vsub.f32 %v217, %v473
    %v730 = vsub.f32 %v218, %v474
    %v731 = vsub.f32 %v219, %v475
    %v732 = vsub.f32 %v220, %v476
    %v733 = vsub.f32 %v221, %v477
    %v734 = vsub.f32 %v222, %v478
    %v735 = vsub.f32 %v223, %v479
    %v736 = vsub.f32 %v224, %v480
    %v737 = vsub.f32 %v225, %v481
    %v738 = vsub.f32 %v226, %v482
    %v739 = vsub.f32 %v227, %v483
    %v740 = vsub.f32 %v228, %v484
    %v741 = vsub.f32 %v229, %v485
    %v742 = vsub.f32 %v230, %v486
    %v743 = vsub.f32 %v231, %v487
    %v744 = vsub.f32 %v232, %v488
    %v745 = vsub.f32 %v233, %v489
    %v746 = vsub.f32 %v234, %v490
    %v747 = vsub.f32 %v235, %v491
    %v748 = vsub.f32 %v236, %v492
    %v749 = vsub.f32 %v237, %v493
    %v750 = vsub.f32 %v238, %v494
    %v751 = vsub.f32 %v239, %v495
    %v752 = vsub.f32 %v240, %v496
    %v753 = vsub.f32 %v241, %v497
    %v754 = vsub.f32 %v242, %v498
    %v755 = vsub.f32 %v243, %v499
    %v756 = vsub.f32 %v244, %v500
    %v757 = vsub.f32 %v245, %v501
    %v758 = vsub.f32 %v246, %v502
    %v759 = vsub.f32 %v247, %v503
    %v760 = vsub.f32 %v248, %v504
    %v761 = vsub.f32 %v249, %v505
    %v762 = vsub.f32 %v250, %v506
    %v763 = vsub.f32 %v251, %v507
    %v764 = vsub.f32 %v252, %v508
    %v765 = vsub.f32 %v253, %v509
    %v766 = vsub.f32 %v254, %v510
    %v767 = vsub.f32 %v255, %v511
    %v768 = vsub.f32 %v256, %v512
    %v769 = vsub.f32 %v257, %v513
    %v770 = vsub.f32 %v258, %v514
    %v771 = vsub.f32 %v259, %v515
    %v772 = vsub.f32 %v260, %v516
    %v773 = vsub.f32 %v261, %v517
    %v774 = vsub.f32 %v262, %v518
    %v775 = vsub.f32 %v263, %v519
    %v776 = vsub.f32 %v264, %v520
    %v777 = vsub.f32 %v265, %v521
    %v778 = vsub.f32 %v266, %v522
    %v779 = vsub.f32 %v267, %v523
    %v780 = vsub.f32 %v268, %v524
    %v781 = vsub.f32 %v269, %v525
    %v782 = vsub.f32 %v270, %v526
    %v783 = vsub.f32 %v271, %v527
    %v784 = vsub.f32 %v272, %v528
    %v785 = vsub.f32 %v273, %v529
    %v786 = vmul.f32 %v530, %v530
    %v787 = vmul.f32 %v531, %v531
    %v788 = vmul.f32 %v532, %v532
    %v789 = vmul.f32 %v533, %v533
    %v790 = vmul.f32 %v534, %v534
    %v791 = vmul.f32 %v535, %v535
    %v792 = vmul.f32 %v536, %v536
    %v793 = vmul.f32 %v537, %v537
    %v794 = vmul.f32 %v538, %v538
    %v795 = vmul.f32 %v539, %v539
    %v796 = vmul.f32 %v540, %v540
    %v797 = vmul.f32 %v541, %v541
    %v798 = vmul.f32 %v542, %v542
    %v799 = vmul.f32 %v543, %v543
    %v800 = vmul.f32 %v544, %v544
    %v801 = vmul.f32 %v545, %v545
    %v802 = vmul.f32 %v546, %v546
    %v803 = vmul.f32 %v547, %v547
    %v804 = vmul.f32 %v548, %v548
    %v805 = vmul.f32 %v549, %v549
    %v806 = vmul.f32 %v550, %v550
    %v807 = vmul.f32 %v551, %v551
    %v808 = vmul.f32 %v552, %v552
    %v809 = vmul.f32 %v553, %v553
    %v810 = vmul.f32 %v554, %v554
    %v811 = vmul.f32 %v555, %v555
    %v812 = vmul.f32 %v556, %v556
    %v813 = vmul.f32 %v557, %v557
    %v814 = vmul.f32 %v558, %v558
    %v815 = vmul.f32 %v559, %v559
    %v816 = vmul.f32 %v560, %v560
    %v817 = vmul.f32 %v561, %v561
    %v818 = vmul.f32 %v562, %v562
    %v819 = vmul.f32 %v563, %v563
    %v820 = vmul.f32 %v564, %v564
    %v821 = vmul.f32 %v565, %v565
    %v822 = vmul.f32 %v566, %v566
    %v823 = vmul.f32 %v567, %v567
    %v824 = vmul.f32 %v568, %v568
    %v825 = vmul.f32 %v569, %v569
    %v826 = vmul.f32 %v570, %v570
    %v827 = vmul.f32 %v571, %v571
    %v828 = vmul.f32 %v572, %v572
    %v829 = vmul.f32 %v573, %v573
    %v830 = vmul.f32 %v574, %v574
    %v831 = vmul.f32 %v575, %v575
    %v832 = vmul.f32 %v576, %v576
    %v833 = vmul.f32 %v577, %v577
    %v834 = vmul.f32 %v578, %v578
    %v835 = vmul.f32 %v579, %v579
    %v836 = vmul.f32 %v580, %v580
    %v837 = vmul.f32 %v581, %v581
    %v838 = vmul.f32 %v582, %v582
    %v839 = vmul.f32 %v583, %v583
    %v840 = vmul.f32 %v584, %v584
    %v841 = vmul.f32 %v585, %v585
    %v842 = vmul.f32 %v586, %v586
    %v843 = vmul.f32 %v587, %v587
    %v844 = vmul.f32 %v588, %v588
    %v845 = vmul.f32 %v589, %v589
    %v846 = vmul.f32 %v590, %v590
    %v847 = vmul.f32 %v591, %v591
    %v848 = vmul.f32 %v592, %v592
    %v849 = vmul.f32 %v593, %v593
    %v850 = vmul.f32 %v594, %v594
    %v851 = vmul.f32 %v595, %v595
    %v852 = vmul.f32 %v596, %v596
    %v853 = vmul.f32 %v597, %v597
    %v854 = vmul.f32 %v598, %v598
    %v855 = vmul.f32 %v599, %v599
    %v856 = vmul.f32 %v600, %v600
    %v857 = vmul.f32 %v601, %v601
    %v858 = vmul.f32 %v602, %v602
    %v859 = vmul.f32 %v603, %v603
    %v860 = vmul.f32 %v604, %v604
    %v861 = vmul.f32 %v605, %v605
    %v862 = vmul.f32 %v606, %v606
    %v863 = vmul.f32 %v607, %v607
    %v864 = vmul.f32 %v608, %v608
    %v865 = vmul.f32 %v609, %v609
    %v866 = vmul.f32 %v610, %v610
    %v867 = vmul.f32 %v611, %v611
    %v868 = vmul.f32 %v612, %v612
    %v869 = vmul.f32 %v613, %v613
    %v870 = vmul.f32 %v614, %v614
    %v871 = vmul.f32 %v615, %v615
    %v872 = vmul.f32 %v616, %v616
    %v873 = vmul.f32 %v617, %v617
    %v874 = vmul.f32 %v618, %v618
    %v875 = vmul.f32 %v619, %v619
    %v876 = vmul.f32 %v620, %v620
    %v877 = vmul.f32 %v621, %v621
    %v878 = vmul.f32 %v622, %v622
    %v879 = vmul.f32 %v623, %v623
    %v880 = vmul.f32 %v624, %v624
    %v881 = vmul.f32 %v625, %v625
    %v882 = vmul.f32 %v626, %v626
    %v883 = vmul.f32 %v627, %v627
    %v884 = vmul.f32 %v628, %v628
    %v885 = vmul.f32 %v629, %v629
    %v886 = vmul.f32 %v630, %v630
    %v887 = vmul.f32 %v631, %v631
    %v888 = vmul.f32 %v632, %v632
    %v889 = vmul.f32 %v633, %v633
    %v890 = vmul.f32 %v634, %v634
    %v891 = vmul.f32 %v635, %v635
    %v892 = vmul.f32 %v636, %v636
    %v893 = vmul.f32 %v637, %v637
    %v894 = vmul.f32 %v638, %v638
    %v895 = vmul.f32 %v639, %v639
    %v896 = vmul.f32 %v640, %v640
    %v897 = vmul.f32 %v641, %v641
    %v898 = vmul.f32 %v642, %v642
    %v899 = vmul.f32 %v643, %v643
    %v900 = vmul.f32 %v644, %v644
    %v901 = vmul.f32 %v645, %v645
    %v902 = vmul.f32 %v646, %v646
    %v903 = vmul.f32 %v647, %v647
    %v904 = vmul.f32 %v648, %v648
    %v905 = vmul.f32 %v649, %v649
    %v906 = vmul.f32 %v650, %v650
    %v907 = vmul.f32 %v651, %v651
    %v908 = vmul.f32 %v652, %v652
    %v909 = vmul.f32 %v653, %v653
    %v910 = vmul.f32 %v654, %v654
    %v911 = vmul.f32 %v655, %v655
    %v912 = vmul.f32 %v656, %v656
    %v913 = vmul.f32 %v657, %v657
    %v914 = vmul.f32 %v658, %v658
    %v915 = vmul.f32 %v659, %v659
    %v916 = vmul.f32 %v660, %v660
    %v917 = vmul.f32 %v661, %v661
    %v918 = vmul.f32 %v662, %v662
    %v919 = vmul.f32 %v663, %v663
    %v920 = vmul.f32 %v664, %v664
    %v921 = vmul.f32 %v665, %v665
    %v922 = vmul.f32 %v666, %v666
    %v923 = vmul.f32 %v667, %v667
    %v924 = vmul.f32 %v668, %v668
    %v925 = vmul.f32 %v669, %v669
    %v926 = vmul.f32 %v670, %v670
    %v927 = vmul.f32 %v671, %v671
    %v928 = vmul.f32 %v672, %v672
    %v929 = vmul.f32 %v673, %v673
    %v930 = vmul.f32 %v674, %v674
    %v931 = vmul.f32 %v675, %v675
    %v932 = vmul.f32 %v676, %v676
    %v933 = vmul.f32 %v677, %v677
    %v934 = vmul.f32 %v678, %v678
    %v935 = vmul.f32 %v679, %v679
    %v936 = vmul.f32 %v680, %v680
    %v937 = vmul.f32 %v681, %v681
    %v938 = vmul.f32 %v682, %v682
    %v939 = vmul.f32 %v683, %v683
    %v940 = vmul.f32 %v684, %v684
    %v941 = vmul.f32 %v685, %v685
    %v942 = vmul.f32 %v686, %v686
    %v943 = vmul.f32 %v687, %v687
    %v944 = vmul.f32 %v688, %v688
    %v945 = vmul.f32 %v689, %v689
    %v946 = vmul.f32 %v690, %v690
    %v947 = vmul.f32 %v691, %v691
    %v948 = vmul.f32 %v692, %v692
    %v949 = vmul.f32 %v693, %v693
    %v950 = vmul.f32 %v694, %v694
    %v951 = vmul.f32 %v695, %v695
    %v952 = vmul.f32 %v696, %v696
    %v953 = vmul.f32 %v697, %v697
    %v954 = vmul.f32 %v698, %v698
    %v955 = vmul.f32 %v699, %v699
    %v956 = vmul.f32 %v700, %v700
    %v957 = vmul.f32 %v701, %v701
    %v958 = vmul.f32 %v702, %v702
    %v959 = vmul.f32 %v703, %v703
    %v960 = vmul.f32 %v704, %v704
    %v961 = vmul.f32 %v705, %v705
    %v962 = vmul.f32 %v706, %v706
    %v963 = vmul.f32 %v707, %v707
    %v964 = vmul.f32 %v708, %v708
    %v965 = vmul.f32 %v709, %v709
    %v966 = vmul.f32 %v710, %v710
    %v967 = vmul.f32 %v711, %v711
    %v968 = vmul.f32 %v712, %v712
    %v969 = vmul.f32 %v713, %v713
    %v970 = vmul.f32 %v714, %v714
    %v971 = vmul.f32 %v715, %v715
    %v972 = vmul.f32 %v716, %v716
    %v973 = vmul.f32 %v717, %v717
    %v974 = vmul.f32 %v718, %v718
    %v975 = vmul.f32 %v719, %v719
    %v976 = vmul.f32 %v720, %v720
    %v977 = vmul.f32 %v721, %v721
    %v978 = vmul.f32 %v722, %v722
    %v979 = vmul.f32 %v723, %v723
    %v980 = vmul.f32 %v724, %v724
    %v981 = vmul.f32 %v725, %v725
    %v982 = vmul.f32 %v726, %v726
    %v983 = vmul.f32 %v727, %v727
    %v984 = vmul.f32 %v728, %v728
    %v985 = vmul.f32 %v729, %v729
    %v986 = vmul.f32 %v730, %v730
    %v987 = vmul.f32 %v731, %v731
    %v988 = vmul.f32 %v732, %v732
    %v989 = vmul.f32 %v733, %v733
    %v990 = vmul.f32 %v734, %v734
    %v991 = vmul.f32 %v735, %v735
    %v992 = vmul.f32 %v736, %v736
    %v993 = vmul.f32 %v737, %v737
    %v994 = vmul.f32 %v738, %v738
    %v995 = vmul.f32 %v739, %v739
    %v996 = vmul.f32 %v740, %v740
    %v997 = vmul.f32 %v741, %v741
    %v998 = vmul.f32 %v742, %v742
    %v999 = vmul.f32 %v743, %v743
    %v1000 = vmul.f32 %v744, %v744
    %v1001 = vmul.f32 %v745, %v745
    %v1002 = vmul.f32 %v746, %v746
    %v1003 = vmul.f32 %v747, %v747
    %v1004 = vmul.f32 %v748, %v748
    %v1005 = vmul.f32 %v749, %v749
    %v1006 = vmul.f32 %v750, %v750
    %v1007 = vmul.f32 %v751, %v751
    %v1008 = vmul.f32 %v752, %v752
    %v1009 = vmul.f32 %v753, %v753
    %v1010 = vmul.f32 %v754, %v754
    %v1011 = vmul.f32 %v755, %v755
    %v1012 = vmul.f32 %v756, %v756
    %v1013 = vmul.f32 %v757, %v757
    %v1014 = vmul.f32 %v758, %v758
    %v1015 = vmul.f32 %v759, %v759
    %v1016 = vmul.f32 %v760, %v760
    %v1017 = vmul.f32 %v761, %v761
    %v1018 = vmul.f32 %v762, %v762
    %v1019 = vmul.f32 %v763, %v763
    %v1020 = vmul.f32 %v764, %v764
    %v1021 = vmul.f32 %v765, %v765
    %v1022 = vmul.f32 %v766, %v766
    %v1023 = vmul.f32 %v767, %v767
    %v1024 = vmul.f32 %v768, %v768
    %v1025 = vmul.f32 %v769, %v769
    %v1026 = vmul.f32 %v770, %v770
    %v1027 = vmul.f32 %v771, %v771
    %v1028 = vmul.f32 %v772, %v772
    %v1029 = vmul.f32 %v773, %v773
    %v1030 = vmul.f32 %v774, %v774
    %v1031 = vmul.f32 %v775, %v775
    %v1032 = vmul.f32 %v776, %v776
    %v1033 = vmul.f32 %v777, %v777
    %v1034 = vmul.f32 %v778, %v778
    %v1035 = vmul.f32 %v779, %v779
    %v1036 = vmul.f32 %v780, %v780
    %v1037 = vmul.f32 %v781, %v781
    %v1038 = vmul.f32 %v782, %v782
    %v1039 = vmul.f32 %v783, %v783
    %v1040 = vmul.f32 %v784, %v784
    %v1041 = vmul.f32 %v785, %v785
    %v1042 = vld [vmem:[#allocation2] sm:$0xff]
    %vm1043 = vcmask 261120
    %v1044 = vsel %vm1043, %v786, 0.0
    %v1045 = vsel %vm1043, %v787, 0.0
    %v1046 = vadd.f32 %v1044, %v1045
    %v1047 = vsel %vm1043, %v788, 0.0
    %v1048 = vadd.f32 %v1046, %v1047
    %v1049 = vsel %vm1043, %v789, 0.0
    %v1050 = vadd.f32 %v1048, %v1049
    %v1051 = vsel %vm1043, %v790, 0.0
    %v1052 = vadd.f32 %v1050, %v1051
    %v1053 = vsel %vm1043, %v791, 0.0
    %v1054 = vadd.f32 %v1052, %v1053
    %v1055 = vsel %vm1043, %v792, 0.0
    %v1056 = vadd.f32 %v1054, %v1055
    %v1057 = vsel %vm1043, %v793, 0.0
    %v1058 = vadd.f32 %v1056, %v1057
    %v1059 = vsel %vm1043, %v794, 0.0
    %v1060 = vadd.f32 %v1058, %v1059
    %v1061 = vsel %vm1043, %v795, 0.0
    %v1062 = vadd.f32 %v1060, %v1061
    %v1063 = vsel %vm1043, %v796, 0.0
    %v1064 = vadd.f32 %v1062, %v1063
    %v1065 = vsel %vm1043, %v797, 0.0
    %v1066 = vadd.f32 %v1064, %v1065
    %v1067 = vsel %vm1043, %v798, 0.0
    %v1068 = vadd.f32 %v1066, %v1067
    %v1069 = vsel %vm1043, %v799, 0.0
    %v1070 = vadd.f32 %v1068, %v1069
    %v1071 = vsel %vm1043, %v800, 0.0
    %v1072 = vadd.f32 %v1070, %v1071
    %v1073 = vsel %vm1043, %v801, 0.0
    %v1074 = vadd.f32 %v1072, %v1073
    %v1075 = vsel %vm1043, %v802, 0.0
    %v1076 = vadd.f32 %v1074, %v1075
    %v1077 = vsel %vm1043, %v803, 0.0
    %v1078 = vadd.f32 %v1076, %v1077
    %v1079 = vsel %vm1043, %v804, 0.0
    %v1080 = vadd.f32 %v1078, %v1079
    %v1081 = vsel %vm1043, %v805, 0.0
    %v1082 = vadd.f32 %v1080, %v1081
    %v1083 = vsel %vm1043, %v806, 0.0
    %v1084 = vadd.f32 %v1082, %v1083
    %v1085 = vsel %vm1043, %v807, 0.0
    %v1086 = vadd.f32 %v1084, %v1085
    %v1087 = vsel %vm1043, %v808, 0.0
    %v1088 = vadd.f32 %v1086, %v1087
    %v1089 = vsel %vm1043, %v809, 0.0
    %v1090 = vadd.f32 %v1088, %v1089
    %v1091 = vsel %vm1043, %v810, 0.0
    %v1092 = vadd.f32 %v1090, %v1091
    %v1093 = vsel %vm1043, %v811, 0.0
    %v1094 = vadd.f32 %v1092, %v1093
    %v1095 = vsel %vm1043, %v812, 0.0
    %v1096 = vadd.f32 %v1094, %v1095
    %v1097 = vsel %vm1043, %v813, 0.0
    %v1098 = vadd.f32 %v1096, %v1097
    %v1099 = vsel %vm1043, %v814, 0.0
    %v1100 = vadd.f32 %v1098, %v1099
    %v1101 = vsel %vm1043, %v815, 0.0
    %v1102 = vadd.f32 %v1100, %v1101
    %v1103 = vsel %vm1043, %v816, 0.0
    %v1104 = vadd.f32 %v1102, %v1103
    %v1105 = vsel %vm1043, %v817, 0.0
    %v1106 = vadd.f32 %v1104, %v1105
    %v1107 = vsel %vm1043, %v818, 0.0
    %v1108 = vadd.f32 %v1106, %v1107
    %v1109 = vsel %vm1043, %v819, 0.0
    %v1110 = vadd.f32 %v1108, %v1109
    %v1111 = vsel %vm1043, %v820, 0.0
    %v1112 = vadd.f32 %v1110, %v1111
    %v1113 = vsel %vm1043, %v821, 0.0
    %v1114 = vadd.f32 %v1112, %v1113
    %v1115 = vsel %vm1043, %v822, 0.0
    %v1116 = vadd.f32 %v1114, %v1115
    %v1117 = vsel %vm1043, %v823, 0.0
    %v1118 = vadd.f32 %v1116, %v1117
    %v1119 = vsel %vm1043, %v824, 0.0
    %v1120 = vadd.f32 %v1118, %v1119
    %v1121 = vsel %vm1043, %v825, 0.0
    %v1122 = vadd.f32 %v1120, %v1121
    %v1123 = vsel %vm1043, %v826, 0.0
    %v1124 = vadd.f32 %v1122, %v1123
    %v1125 = vsel %vm1043, %v827, 0.0
    %v1126 = vadd.f32 %v1124, %v1125
    %v1127 = vsel %vm1043, %v828, 0.0
    %v1128 = vadd.f32 %v1126, %v1127
    %v1129 = vsel %vm1043, %v829, 0.0
    %v1130 = vadd.f32 %v1128, %v1129
    %v1131 = vsel %vm1043, %v830, 0.0
    %v1132 = vadd.f32 %v1130, %v1131
    %v1133 = vsel %vm1043, %v831, 0.0
    %v1134 = vadd.f32 %v1132, %v1133
    %v1135 = vsel %vm1043, %v832, 0.0
    %v1136 = vadd.f32 %v1134, %v1135
    %v1137 = vsel %vm1043, %v833, 0.0
    %v1138 = vadd.f32 %v1136, %v1137
    %v1139 = vsel %vm1043, %v834, 0.0
    %v1140 = vadd.f32 %v1138, %v1139
    %v1141 = vsel %vm1043, %v835, 0.0
    %v1142 = vadd.f32 %v1140, %v1141
    %v1143 = vsel %vm1043, %v836, 0.0
    %v1144 = vadd.f32 %v1142, %v1143
    %v1145 = vsel %vm1043, %v837, 0.0
    %v1146 = vadd.f32 %v1144, %v1145
    %v1147 = vsel %vm1043, %v838, 0.0
    %v1148 = vadd.f32 %v1146, %v1147
    %v1149 = vsel %vm1043, %v839, 0.0
    %v1150 = vadd.f32 %v1148, %v1149
    %v1151 = vsel %vm1043, %v840, 0.0
    %v1152 = vadd.f32 %v1150, %v1151
    %v1153 = vsel %vm1043, %v841, 0.0
    %v1154 = vadd.f32 %v1152, %v1153
    %v1155 = vsel %vm1043, %v842, 0.0
    %v1156 = vadd.f32 %v1154, %v1155
    %v1157 = vsel %vm1043, %v843, 0.0
    %v1158 = vadd.f32 %v1156, %v1157
    %v1159 = vsel %vm1043, %v844, 0.0
    %v1160 = vadd.f32 %v1158, %v1159
    %v1161 = vsel %vm1043, %v845, 0.0
    %v1162 = vadd.f32 %v1160, %v1161
    %v1163 = vsel %vm1043, %v846, 0.0
    %v1164 = vadd.f32 %v1162, %v1163
    %v1165 = vsel %vm1043, %v847, 0.0
    %v1166 = vadd.f32 %v1164, %v1165
    %v1167 = vsel %vm1043, %v848, 0.0
    %v1168 = vadd.f32 %v1166, %v1167
    %v1169 = vsel %vm1043, %v849, 0.0
    %v1170 = vadd.f32 %v1168, %v1169
    %v1171 = vsel %vm1043, %v850, 0.0
    %v1172 = vadd.f32 %v1170, %v1171
    %v1173 = vsel %vm1043, %v851, 0.0
    %v1174 = vadd.f32 %v1172, %v1173
    %v1175 = vsel %vm1043, %v852, 0.0
    %v1176 = vadd.f32 %v1174, %v1175
    %v1177 = vsel %vm1043, %v853, 0.0
    %v1178 = vadd.f32 %v1176, %v1177
    %v1179 = vsel %vm1043, %v854, 0.0
    %v1180 = vadd.f32 %v1178, %v1179
    %v1181 = vsel %vm1043, %v855, 0.0
    %v1182 = vadd.f32 %v1180, %v1181
    %v1183 = vsel %vm1043, %v856, 0.0
    %v1184 = vadd.f32 %v1182, %v1183
    %v1185 = vsel %vm1043, %v857, 0.0
    %v1186 = vadd.f32 %v1184, %v1185
    %v1187 = vsel %vm1043, %v858, 0.0
    %v1188 = vadd.f32 %v1186, %v1187
    %v1189 = vsel %vm1043, %v859, 0.0
    %v1190 = vadd.f32 %v1188, %v1189
    %v1191 = vsel %vm1043, %v860, 0.0
    %v1192 = vadd.f32 %v1190, %v1191
    %v1193 = vsel %vm1043, %v861, 0.0
    %v1194 = vadd.f32 %v1192, %v1193
    %v1195 = vsel %vm1043, %v862, 0.0
    %v1196 = vadd.f32 %v1194, %v1195
    %v1197 = vsel %vm1043, %v863, 0.0
    %v1198 = vadd.f32 %v1196, %v1197
    %v1199 = vsel %vm1043, %v864, 0.0
    %v1200 = vadd.f32 %v1198, %v1199
    %v1201 = vsel %vm1043, %v865, 0.0
    %v1202 = vadd.f32 %v1200, %v1201
    %v1203 = vsel %vm1043, %v866, 0.0
    %v1204 = vadd.f32 %v1202, %v1203
    %v1205 = vsel %vm1043, %v867, 0.0
    %v1206 = vadd.f32 %v1204, %v1205
    %v1207 = vsel %vm1043, %v868, 0.0
    %v1208 = vadd.f32 %v1206, %v1207
    %v1209 = vsel %vm1043, %v869, 0.0
    %v1210 = vadd.f32 %v1208, %v1209
    %v1211 = vsel %vm1043, %v870, 0.0
    %v1212 = vadd.f32 %v1210, %v1211
    %v1213 = vsel %vm1043, %v871, 0.0
    %v1214 = vadd.f32 %v1212, %v1213
    %v1215 = vsel %vm1043, %v872, 0.0
    %v1216 = vadd.f32 %v1214, %v1215
    %v1217 = vsel %vm1043, %v873, 0.0
    %v1218 = vadd.f32 %v1216, %v1217
    %v1219 = vsel %vm1043, %v874, 0.0
    %v1220 = vadd.f32 %v1218, %v1219
    %v1221 = vsel %vm1043, %v875, 0.0
    %v1222 = vadd.f32 %v1220, %v1221
    %v1223 = vsel %vm1043, %v876, 0.0
    %v1224 = vadd.f32 %v1222, %v1223
    %v1225 = vsel %vm1043, %v877, 0.0
    %v1226 = vadd.f32 %v1224, %v1225
    %v1227 = vsel %vm1043, %v878, 0.0
    %v1228 = vadd.f32 %v1226, %v1227
    %v1229 = vsel %vm1043, %v879, 0.0
    %v1230 = vadd.f32 %v1228, %v1229
    %v1231 = vsel %vm1043, %v880, 0.0
    %v1232 = vadd.f32 %v1230, %v1231
    %v1233 = vsel %vm1043, %v881, 0.0
    %v1234 = vadd.f32 %v1232, %v1233
    %v1235 = vsel %vm1043, %v882, 0.0
    %v1236 = vadd.f32 %v1234, %v1235
    %v1237 = vsel %vm1043, %v883, 0.0
    %v1238 = vadd.f32 %v1236, %v1237
    %v1239 = vsel %vm1043, %v884, 0.0
    %v1240 = vadd.f32 %v1238, %v1239
    %v1241 = vsel %vm1043, %v885, 0.0
    %v1242 = vadd.f32 %v1240, %v1241
    %v1243 = vsel %vm1043, %v886, 0.0
    %v1244 = vadd.f32 %v1242, %v1243
    %v1245 = vsel %vm1043, %v887, 0.0
    %v1246 = vadd.f32 %v1244, %v1245
    %v1247 = vsel %vm1043, %v888, 0.0
    %v1248 = vadd.f32 %v1246, %v1247
    %v1249 = vsel %vm1043, %v889, 0.0
    %v1250 = vadd.f32 %v1248, %v1249
    %v1251 = vsel %vm1043, %v890, 0.0
    %v1252 = vadd.f32 %v1250, %v1251
    %v1253 = vsel %vm1043, %v891, 0.0
    %v1254 = vadd.f32 %v1252, %v1253
    %v1255 = vsel %vm1043, %v892, 0.0
    %v1256 = vadd.f32 %v1254, %v1255
    %v1257 = vsel %vm1043, %v893, 0.0
    %v1258 = vadd.f32 %v1256, %v1257
    %v1259 = vsel %vm1043, %v894, 0.0
    %v1260 = vadd.f32 %v1258, %v1259
    %v1261 = vsel %vm1043, %v895, 0.0
    %v1262 = vadd.f32 %v1260, %v1261
    %v1263 = vsel %vm1043, %v896, 0.0
    %v1264 = vadd.f32 %v1262, %v1263
    %v1265 = vsel %vm1043, %v897, 0.0
    %v1266 = vadd.f32 %v1264, %v1265
    %v1267 = vsel %vm1043, %v898, 0.0
    %v1268 = vadd.f32 %v1266, %v1267
    %v1269 = vsel %vm1043, %v899, 0.0
    %v1270 = vadd.f32 %v1268, %v1269
    %v1271 = vsel %vm1043, %v900, 0.0
    %v1272 = vadd.f32 %v1270, %v1271
    %v1273 = vsel %vm1043, %v901, 0.0
    %v1274 = vadd.f32 %v1272, %v1273
    %v1275 = vsel %vm1043, %v902, 0.0
    %v1276 = vadd.f32 %v1274, %v1275
    %v1277 = vsel %vm1043, %v903, 0.0
    %v1278 = vadd.f32 %v1276, %v1277
    %v1279 = vsel %vm1043, %v904, 0.0
    %v1280 = vadd.f32 %v1278, %v1279
    %v1281 = vsel %vm1043, %v905, 0.0
    %v1282 = vadd.f32 %v1280, %v1281
    %v1283 = vsel %vm1043, %v906, 0.0
    %v1284 = vadd.f32 %v1282, %v1283
    %v1285 = vsel %vm1043, %v907, 0.0
    %v1286 = vadd.f32 %v1284, %v1285
    %v1287 = vsel %vm1043, %v908, 0.0
    %v1288 = vadd.f32 %v1286, %v1287
    %v1289 = vsel %vm1043, %v909, 0.0
    %v1290 = vadd.f32 %v1288, %v1289
    %v1291 = vsel %vm1043, %v910, 0.0
    %v1292 = vadd.f32 %v1290, %v1291
    %v1293 = vsel %vm1043, %v911, 0.0
    %v1294 = vadd.f32 %v1292, %v1293
    %v1295 = vsel %vm1043, %v912, 0.0
    %v1296 = vadd.f32 %v1294, %v1295
    %v1297 = vsel %vm1043, %v913, 0.0
    %v1298 = vadd.f32 %v1296, %v1297
    %v1299 = vsel %vm1043, %v914, 0.0
    %v1300 = vadd.f32 %v1298, %v1299
    %v1301 = vsel %vm1043, %v915, 0.0
    %v1302 = vadd.f32 %v1300, %v1301
    %v1303 = vsel %vm1043, %v916, 0.0
    %v1304 = vadd.f32 %v1302, %v1303
    %v1305 = vsel %vm1043, %v917, 0.0
    %v1306 = vadd.f32 %v1304, %v1305
    %v1307 = vsel %vm1043, %v918, 0.0
    %v1308 = vadd.f32 %v1306, %v1307
    %v1309 = vsel %vm1043, %v919, 0.0
    %v1310 = vadd.f32 %v1308, %v1309
    %v1311 = vsel %vm1043, %v920, 0.0
    %v1312 = vadd.f32 %v1310, %v1311
    %v1313 = vsel %vm1043, %v921, 0.0
    %v1314 = vadd.f32 %v1312, %v1313
    %v1315 = vsel %vm1043, %v922, 0.0
    %v1316 = vadd.f32 %v1314, %v1315
    %v1317 = vsel %vm1043, %v923, 0.0
    %v1318 = vadd.f32 %v1316, %v1317
    %v1319 = vsel %vm1043, %v924, 0.0
    %v1320 = vadd.f32 %v1318, %v1319
    %v1321 = vsel %vm1043, %v925, 0.0
    %v1322 = vadd.f32 %v1320, %v1321
    %v1323 = vsel %vm1043, %v926, 0.0
    %v1324 = vadd.f32 %v1322, %v1323
    %v1325 = vsel %vm1043, %v927, 0.0
    %v1326 = vadd.f32 %v1324, %v1325
    %v1327 = vsel %vm1043, %v928, 0.0
    %v1328 = vadd.f32 %v1326, %v1327
    %v1329 = vsel %vm1043, %v929, 0.0
    %v1330 = vadd.f32 %v1328, %v1329
    %v1331 = vsel %vm1043, %v930, 0.0
    %v1332 = vadd.f32 %v1330, %v1331
    %v1333 = vsel %vm1043, %v931, 0.0
    %v1334 = vadd.f32 %v1332, %v1333
    %v1335 = vsel %vm1043, %v932, 0.0
    %v1336 = vadd.f32 %v1334, %v1335
    %v1337 = vsel %vm1043, %v933, 0.0
    %v1338 = vadd.f32 %v1336, %v1337
    %v1339 = vsel %vm1043, %v934, 0.0
    %v1340 = vadd.f32 %v1338, %v1339
    %v1341 = vsel %vm1043, %v935, 0.0
    %v1342 = vadd.f32 %v1340, %v1341
    %v1343 = vsel %vm1043, %v936, 0.0
    %v1344 = vadd.f32 %v1342, %v1343
    %v1345 = vsel %vm1043, %v937, 0.0
    %v1346 = vadd.f32 %v1344, %v1345
    %v1347 = vsel %vm1043, %v938, 0.0
    %v1348 = vadd.f32 %v1346, %v1347
    %v1349 = vsel %vm1043, %v939, 0.0
    %v1350 = vadd.f32 %v1348, %v1349
    %v1351 = vsel %vm1043, %v940, 0.0
    %v1352 = vadd.f32 %v1350, %v1351
    %v1353 = vsel %vm1043, %v941, 0.0
    %v1354 = vadd.f32 %v1352, %v1353
    %v1355 = vsel %vm1043, %v942, 0.0
    %v1356 = vadd.f32 %v1354, %v1355
    %v1357 = vsel %vm1043, %v943, 0.0
    %v1358 = vadd.f32 %v1356, %v1357
    %v1359 = vsel %vm1043, %v944, 0.0
    %v1360 = vadd.f32 %v1358, %v1359
    %v1361 = vsel %vm1043, %v945, 0.0
    %v1362 = vadd.f32 %v1360, %v1361
    %v1363 = vsel %vm1043, %v946, 0.0
    %v1364 = vadd.f32 %v1362, %v1363
    %v1365 = vsel %vm1043, %v947, 0.0
    %v1366 = vadd.f32 %v1364, %v1365
    %v1367 = vsel %vm1043, %v948, 0.0
    %v1368 = vadd.f32 %v1366, %v1367
    %v1369 = vsel %vm1043, %v949, 0.0
    %v1370 = vadd.f32 %v1368, %v1369
    %v1371 = vsel %vm1043, %v950, 0.0
    %v1372 = vadd.f32 %v1370, %v1371
    %v1373 = vsel %vm1043, %v951, 0.0
    %v1374 = vadd.f32 %v1372, %v1373
    %v1375 = vsel %vm1043, %v952, 0.0
    %v1376 = vadd.f32 %v1374, %v1375
    %v1377 = vsel %vm1043, %v953, 0.0
    %v1378 = vadd.f32 %v1376, %v1377
    %v1379 = vsel %vm1043, %v954, 0.0
    %v1380 = vadd.f32 %v1378, %v1379
    %v1381 = vsel %vm1043, %v955, 0.0
    %v1382 = vadd.f32 %v1380, %v1381
    %v1383 = vsel %vm1043, %v956, 0.0
    %v1384 = vadd.f32 %v1382, %v1383
    %v1385 = vsel %vm1043, %v957, 0.0
    %v1386 = vadd.f32 %v1384, %v1385
    %v1387 = vsel %vm1043, %v958, 0.0
    %v1388 = vadd.f32 %v1386, %v1387
    %v1389 = vsel %vm1043, %v959, 0.0
    %v1390 = vadd.f32 %v1388, %v1389
    %v1391 = vsel %vm1043, %v960, 0.0
    %v1392 = vadd.f32 %v1390, %v1391
    %v1393 = vsel %vm1043, %v961, 0.0
    %v1394 = vadd.f32 %v1392, %v1393
    %v1395 = vsel %vm1043, %v962, 0.0
    %v1396 = vadd.f32 %v1394, %v1395
    %v1397 = vsel %vm1043, %v963, 0.0
    %v1398 = vadd.f32 %v1396, %v1397
    %v1399 = vsel %vm1043, %v964, 0.0
    %v1400 = vadd.f32 %v1398, %v1399
    %v1401 = vsel %vm1043, %v965, 0.0
    %v1402 = vadd.f32 %v1400, %v1401
    %v1403 = vsel %vm1043, %v966, 0.0
    %v1404 = vadd.f32 %v1402, %v1403
    %v1405 = vsel %vm1043, %v967, 0.0
    %v1406 = vadd.f32 %v1404, %v1405
    %v1407 = vsel %vm1043, %v968, 0.0
    %v1408 = vadd.f32 %v1406, %v1407
    %v1409 = vsel %vm1043, %v969, 0.0
    %v1410 = vadd.f32 %v1408, %v1409
    %v1411 = vsel %vm1043, %v970, 0.0
    %v1412 = vadd.f32 %v1410, %v1411
    %v1413 = vsel %vm1043, %v971, 0.0
    %v1414 = vadd.f32 %v1412, %v1413
    %v1415 = vsel %vm1043, %v972, 0.0
    %v1416 = vadd.f32 %v1414, %v1415
    %v1417 = vsel %vm1043, %v973, 0.0
    %v1418 = vadd.f32 %v1416, %v1417
    %v1419 = vsel %vm1043, %v974, 0.0
    %v1420 = vadd.f32 %v1418, %v1419
    %v1421 = vsel %vm1043, %v975, 0.0
    %v1422 = vadd.f32 %v1420, %v1421
    %v1423 = vsel %vm1043, %v976, 0.0
    %v1424 = vadd.f32 %v1422, %v1423
    %v1425 = vsel %vm1043, %v977, 0.0
    %v1426 = vadd.f32 %v1424, %v1425
    %v1427 = vsel %vm1043, %v978, 0.0
    %v1428 = vadd.f32 %v1426, %v1427
    %v1429 = vsel %vm1043, %v979, 0.0
    %v1430 = vadd.f32 %v1428, %v1429
    %v1431 = vsel %vm1043, %v980, 0.0
    %v1432 = vadd.f32 %v1430, %v1431
    %v1433 = vsel %vm1043, %v981, 0.0
    %v1434 = vadd.f32 %v1432, %v1433
    %v1435 = vsel %vm1043, %v982, 0.0
    %v1436 = vadd.f32 %v1434, %v1435
    %v1437 = vsel %vm1043, %v983, 0.0
    %v1438 = vadd.f32 %v1436, %v1437
    %v1439 = vsel %vm1043, %v984, 0.0
    %v1440 = vadd.f32 %v1438, %v1439
    %v1441 = vsel %vm1043, %v985, 0.0
    %v1442 = vadd.f32 %v1440, %v1441
    %v1443 = vsel %vm1043, %v986, 0.0
    %v1444 = vadd.f32 %v1442, %v1443
    %v1445 = vsel %vm1043, %v987, 0.0
    %v1446 = vadd.f32 %v1444, %v1445
    %v1447 = vsel %vm1043, %v988, 0.0
    %v1448 = vadd.f32 %v1446, %v1447
    %v1449 = vsel %vm1043, %v989, 0.0
    %v1450 = vadd.f32 %v1448, %v1449
    %v1451 = vsel %vm1043, %v990, 0.0
    %v1452 = vadd.f32 %v1450, %v1451
    %v1453 = vsel %vm1043, %v991, 0.0
    %v1454 = vadd.f32 %v1452, %v1453
    %v1455 = vsel %vm1043, %v992, 0.0
    %v1456 = vadd.f32 %v1454, %v1455
    %v1457 = vsel %vm1043, %v993, 0.0
    %v1458 = vadd.f32 %v1456, %v1457
    %v1459 = vsel %vm1043, %v994, 0.0
    %v1460 = vadd.f32 %v1458, %v1459
    %v1461 = vsel %vm1043, %v995, 0.0
    %v1462 = vadd.f32 %v1460, %v1461
    %v1463 = vsel %vm1043, %v996, 0.0
    %v1464 = vadd.f32 %v1462, %v1463
    %v1465 = vsel %vm1043, %v997, 0.0
    %v1466 = vadd.f32 %v1464, %v1465
    %v1467 = vsel %vm1043, %v998, 0.0
    %v1468 = vadd.f32 %v1466, %v1467
    %v1469 = vsel %vm1043, %v999, 0.0
    %v1470 = vadd.f32 %v1468, %v1469
    %v1471 = vsel %vm1043, %v1000, 0.0
    %v1472 = vadd.f32 %v1470, %v1471
    %v1473 = vsel %vm1043, %v1001, 0.0
    %v1474 = vadd.f32 %v1472, %v1473
    %v1475 = vsel %vm1043, %v1002, 0.0
    %v1476 = vadd.f32 %v1474, %v1475
    %v1477 = vsel %vm1043, %v1003, 0.0
    %v1478 = vadd.f32 %v1476, %v1477
    %v1479 = vsel %vm1043, %v1004, 0.0
    %v1480 = vadd.f32 %v1478, %v1479
    %v1481 = vsel %vm1043, %v1005, 0.0
    %v1482 = vadd.f32 %v1480, %v1481
    %v1483 = vsel %vm1043, %v1006, 0.0
    %v1484 = vadd.f32 %v1482, %v1483
    %v1485 = vsel %vm1043, %v1007, 0.0
    %v1486 = vadd.f32 %v1484, %v1485
    %v1487 = vsel %vm1043, %v1008, 0.0
    %v1488 = vadd.f32 %v1486, %v1487
    %v1489 = vsel %vm1043, %v1009, 0.0
    %v1490 = vadd.f32 %v1488, %v1489
    %v1491 = vsel %vm1043, %v1010, 0.0
    %v1492 = vadd.f32 %v1490, %v1491
    %v1493 = vsel %vm1043, %v1011, 0.0
    %v1494 = vadd.f32 %v1492, %v1493
    %v1495 = vsel %vm1043, %v1012, 0.0
    %v1496 = vadd.f32 %v1494, %v1495
    %v1497 = vsel %vm1043, %v1013, 0.0
    %v1498 = vadd.f32 %v1496, %v1497
    %v1499 = vsel %vm1043, %v1014, 0.0
    %v1500 = vadd.f32 %v1498, %v1499
    %v1501 = vsel %vm1043, %v1015, 0.0
    %v1502 = vadd.f32 %v1500, %v1501
    %v1503 = vsel %vm1043, %v1016, 0.0
    %v1504 = vadd.f32 %v1502, %v1503
    %v1505 = vsel %vm1043, %v1017, 0.0
    %v1506 = vadd.f32 %v1504, %v1505
    %v1507 = vsel %vm1043, %v1018, 0.0
    %v1508 = vadd.f32 %v1506, %v1507
    %v1509 = vsel %vm1043, %v1019, 0.0
    %v1510 = vadd.f32 %v1508, %v1509
    %v1511 = vsel %vm1043, %v1020, 0.0
    %v1512 = vadd.f32 %v1510, %v1511
    %v1513 = vsel %vm1043, %v1021, 0.0
    %v1514 = vadd.f32 %v1512, %v1513
    %v1515 = vsel %vm1043, %v1022, 0.0
    %v1516 = vadd.f32 %v1514, %v1515
    %v1517 = vsel %vm1043, %v1023, 0.0
    %v1518 = vadd.f32 %v1516, %v1517
    %v1519 = vsel %vm1043, %v1024, 0.0
    %v1520 = vadd.f32 %v1518, %v1519
    %v1521 = vsel %vm1043, %v1025, 0.0
    %v1522 = vadd.f32 %v1520, %v1521
    %v1523 = vsel %vm1043, %v1026, 0.0
    %v1524 = vadd.f32 %v1522, %v1523
    %v1525 = vsel %vm1043, %v1027, 0.0
    %v1526 = vadd.f32 %v1524, %v1525
    %v1527 = vsel %vm1043, %v1028, 0.0
    %v1528 = vadd.f32 %v1526, %v1527
    %v1529 = vsel %vm1043, %v1029, 0.0
    %v1530 = vadd.f32 %v1528, %v1529
    %v1531 = vsel %vm1043, %v1030, 0.0
    %v1532 = vadd.f32 %v1530, %v1531
    %v1533 = vsel %vm1043, %v1031, 0.0
    %v1534 = vadd.f32 %v1532, %v1533
    %v1535 = vsel %vm1043, %v1032, 0.0
    %v1536 = vadd.f32 %v1534, %v1535
    %v1537 = vsel %vm1043, %v1033, 0.0
    %v1538 = vadd.f32 %v1536, %v1537
    %v1539 = vsel %vm1043, %v1034, 0.0
    %v1540 = vadd.f32 %v1538, %v1539
    %v1541 = vsel %vm1043, %v1035, 0.0
    %v1542 = vadd.f32 %v1540, %v1541
    %v1543 = vsel %vm1043, %v1036, 0.0
    %v1544 = vadd.f32 %v1542, %v1543
    %v1545 = vsel %vm1043, %v1037, 0.0
    %v1546 = vadd.f32 %v1544, %v1545
    %v1547 = vsel %vm1043, %v1038, 0.0
    %v1548 = vadd.f32 %v1546, %v1547
    %v1549 = vsel %vm1043, %v1039, 0.0
    %v1550 = vadd.f32 %v1548, %v1549
    %v1551 = vsel %vm1043, %v1040, 0.0
    %v1552 = vadd.f32 %v1550, %v1551
    %v1553 = vsel %vm1043, %v1041, 0.0
    %v1554 = vadd.f32 %v1552, %v1553
    %v1555 = vadd.f32 %v1042, %v1554
    %1556 = vst.msk [vmem:[#allocation2] sm:$0xff] %vm1043, %v1555
    // Predicated region
    $region14: #{tpu_custom_call.1} parent=1 // pred_check
      %p1557 = pneg %p12
    $region15: #{tpu_custom_call.1} parent=1 // pred_check_branch
      %1559 = sbr.rel (%p1557) target = $region17
    $region16: #{tpu_custom_call.1} parent=1 // pred_region
      %v1560 = vld [vmem:[#allocation2] sm:$0xff]
      %v1561 = vsel %vm1043, %v1560, 0.0
      %1562 = vadd.xlane.f32.xlu0 %v1561
      %v1563 = vpop.xlane.xlu0 %1562
      %v1564 = vrot.slane %v1563, 4
      %v1565 = vadd.f32 %v1563, %v1564
      %v1566 = vrot.slane %v1565, 2
      %v1567 = vadd.f32 %v1565, %v1566
      %v1568 = vrot.slane %v1567, 1
      %v1569 = vadd.f32 %v1567, %v1568
      %s1570 = vtos %v1569
      %s1571 = scalar_lea.smem [#allocation3], 0
      %1572 = sst [smem:[%s1571]] %s1570
    $region17: #{tpu_custom_call.1} parent=1 // pred_fallthru
      _
    // Predicated region
    $region18: #{tpu_custom_call.1} parent=1 // pred_check
      _
    $region19: #{tpu_custom_call.1} parent=1 // pred_check_branch
      %1574 = sbr.rel (0) target = $region21
    $region20: #{tpu_custom_call.1} parent=1 // pred_region
      %s1576 = ssub.s32 16, 16
      %1577 = vsyncadd [#allocation4], %s1576
      %1580 = dma.smem_to_hbm [#allocation3], 16, %s2, [#allocation4]
    $region21: #{tpu_custom_call.1} parent=1 // pred_fallthru
      _
    // Predicated region
    $region22: #{tpu_custom_call.1} parent=1 // pred_check
      _
    $region23: #{tpu_custom_call.1} parent=1 // pred_check_branch
      %1582 = sbr.rel (0) target = $region25
    $region24: #{tpu_custom_call.1} parent=1 // pred_region
      %1583 = dma.done [#allocation4], 16
    $region25: #{tpu_custom_call.1} parent=1 // pred_fallthru
      _
    %1584 = sfence
    %1585 = vsyncpa [#allocation4], 1

</llo_original>
